<compile_context>
chip_gen: v7x
topology: tpu7x:2x2x1
jax: 0.10.0
libtpu: 0.0.40
codegen_flags: <defaults>
</compile_context>

<pallas_src>
import math

import jax
import jax.numpy as jnp
from jax.experimental import pallas as pl
from jax.experimental.pallas import tpu as pltpu

# ---------------------------------------------------------------------------
# Small synthetic "bert-base-chinese"-like config (lane-dense hidden size)
# ---------------------------------------------------------------------------
B = 2               # batch
S = 8               # sequence length
BS = B * S          # folded rows (matmul M dimension)
H = 128             # hidden size (multiple of 128 -> lane-dense / MXU-wide)
NUM_HEADS = 2
DH = H // NUM_HEADS
INTER = 512         # feed-forward intermediate size (4*H, multiple of 128)
NUM_LAYERS = 2
VOCAB = 100
MAX_POS = 128
EPS = 1e-12
VEC_W = max(INTER, 3 * H)   # packed per-layer vector width (512, lane-aligned)
NUM_VEC_ROWS = 8


# ---------------------------------------------------------------------------
# In-kernel helpers
# ---------------------------------------------------------------------------
def _layernorm(x, gamma, beta):
    mu = jnp.mean(x, axis=-1, keepdims=True)
    var = jnp.mean((x - mu) ** 2, axis=-1, keepdims=True)
    return (x - mu) * jax.lax.rsqrt(var + EPS) * gamma + beta


def _gelu(x):
    # TODO(synk): HF BERT uses exact erf GELU; tanh approximation used here.
    return 0.5 * x * (1.0 + jnp.tanh(0.7978845608028654 * (x + 0.044715 * x * x * x)))


# ---------------------------------------------------------------------------
# One fused kernel: embedding LN + all layers + pooler + entity pooling
# ---------------------------------------------------------------------------
def _encoder_kernel(emb_ref, abias_ref, pmat_ref, csel_ref, eln_ref,
                    wqkv_ref, wo_ref, w1_ref, w2_ref, vec_ref,
                    pw_ref, pb_ref,
                    pooled_ref, ent_ref,
                    x_ref):
    l = pl.program_id(0)

    # --- first layer step: embedding LayerNorm into the resident activation ---
    @pl.when(l == 0)
    def _():
        x_ref[...] = _layernorm(emb_ref[...], eln_ref[0:1, :], eln_ref[1:2, :])

    x = x_ref[...]                               # (BS, H) f32, VMEM-resident
    x16 = x.astype(jnp.bfloat16)

    # Packed per-layer vectors (one resident array, sliced by row).
    vec = vec_ref[l]                             # (8, VEC_W) f32
    bqkv = vec[0:1, 0:3 * H]                     # fused QKV bias (q pre-scaled)
    b1 = vec[1:2, 0:INTER]
    bo = vec[2:3, 0:H]
    ln1g = vec[3:4, 0:H]
    ln1b = vec[4:5, 0:H]
    b2 = vec[5:6, 0:H]
    ln2g = vec[6:7, 0:H]
    ln2b = vec[7:8, 0:H]

    # fused QKV projection (query weights/bias pre-scaled by 1/sqrt(DH))
    qkv = jnp.dot(x16, wqkv_ref[l],
                  preferred_element_type=jnp.float32) + bqkv       # (BS, 3H)
    q = qkv[:, 0:H]
    k = qkv[:, H:2 * H]
    v = qkv[:, 2 * H:3 * H]

    bias = abias_ref[...]                        # (BS, BS) block-diag + key mask
    wo_full = wo_ref[l]                          # (H, H) bf16
    attn = bo                                    # (1, H), broadcasts on first add

    # static unrolled head loop; each head's context folded into the
    # output projection (no lane-axis concatenate)
    for h in range(NUM_HEADS):
        lo = h * DH
        qh = q[:, lo:lo + DH].astype(jnp.bfloat16)
        kh = k[:, lo:lo + DH].astype(jnp.bfloat16)
        vh = v[:, lo:lo + DH].astype(jnp.bfloat16)
        s = jax.lax.dot_general(qh, kh, (((1,), (1,)), ((), ())),
                                preferred_element_type=jnp.float32)  # (BS, BS)
        s = s + bias
        s = s - jnp.max(s, axis=-1, keepdims=True)
        p = jnp.exp(s)
        p = p * pl.reciprocal(jnp.sum(p, axis=-1, keepdims=True), approx=True)
        ctx = jnp.dot(p.astype(jnp.bfloat16), vh,
                      preferred_element_type=jnp.float32)            # (BS, DH)
        attn = attn + jnp.dot(ctx.astype(jnp.bfloat16), wo_full[lo:lo + DH, :],
                              preferred_element_type=jnp.float32)    # (BS, H)

    x1 = _layernorm(x + attn, ln1g, ln1b)

    mid = _gelu(jnp.dot(x1.astype(jnp.bfloat16), w1_ref[l],
                        preferred_element_type=jnp.float32) + b1)
    ffn = jnp.dot(mid.astype(jnp.bfloat16), w2_ref[l],
                  preferred_element_type=jnp.float32) + b2
    x2 = _layernorm(x1 + ffn, ln2g, ln2b)
    x_ref[...] = x2

    # --- last layer step: pooler + entity-masked mean pooling ---
    @pl.when(l == pl.num_programs(0) - 1)
    def _():
        x2_16 = x2.astype(jnp.bfloat16)
        # pool_mat rows already contain mask / clamp(count, 1) -> one matmul
        # gives [head_b0, tail_b0, head_b1, tail_b1] and one unmasked store.
        ent_ref[...] = jnp.dot(pmat_ref[...], x2_16,
                               preferred_element_type=jnp.float32)   # (2B, H)
        # CLS rows gathered via one-hot selection matmul, then pooler.
        cls = jnp.dot(csel_ref[...], x2_16,
                      preferred_element_type=jnp.float32).astype(jnp.bfloat16)
        pooled_ref[...] = jnp.tanh(
            jnp.dot(cls, pw_ref[...], preferred_element_type=jnp.float32)
            + pb_ref[...])                                           # (B, H)


def _encoder_pallas(emb, abias, pool_mat, cls_sel, p):
    full2 = lambda l: (0, 0)
    full3 = lambda l: (0, 0, 0)

    in_specs = [
        pl.BlockSpec((BS, H), full2),                       # emb (pre-LN), resident
        pl.BlockSpec((BS, BS), full2),                      # attention additive mask
        pl.BlockSpec((2 * B, BS), full2),                   # entity pooling matrix (bf16)
        pl.BlockSpec((B, BS), full2),                       # CLS selection matrix (bf16)
        pl.BlockSpec((2, H), full2),                        # emb LN [gamma; beta]
        pl.BlockSpec((NUM_LAYERS, H, 3 * H), full3),        # fused QKV weights (bf16)
        pl.BlockSpec((NUM_LAYERS, H, H), full3),            # attn out proj weights (bf16)
        pl.BlockSpec((NUM_LAYERS, H, INTER), full3),        # ffn in weights (bf16)
        pl.BlockSpec((NUM_LAYERS, INTER, H), full3),        # ffn out weights (bf16)
        pl.BlockSpec((NUM_LAYERS, NUM_VEC_ROWS, VEC_W), full3),  # packed biases/LN
        pl.BlockSpec((H, H), full2),                        # pooler weight (bf16)
        pl.BlockSpec((1, H), full2),                        # pooler bias
    ]
    out_specs = (
        pl.BlockSpec((B, H), full2),                        # pooled
        pl.BlockSpec((2 * B, H), full2),                    # [head_b, tail_b] rows
    )
    return pl.pallas_call(
        _encoder_kernel,
        out_shape=(jax.ShapeDtypeStruct((B, H), jnp.float32),
                   jax.ShapeDtypeStruct((2 * B, H), jnp.float32)),
        grid=(NUM_LAYERS,),
        in_specs=in_specs,
        out_specs=out_specs,
        scratch_shapes=[pltpu.VMEM((BS, H), jnp.float32)],  # resident activation
        compiler_params=pltpu.CompilerParams(
            dimension_semantics=("arbitrary",)),
    )(emb, abias, pool_mat, cls_sel,
      p['emb_ln'], p['wqkv'], p['wo'], p['w1'], p['w2'], p['vecs'],
      p['pool_w'], p['pool_b'])


# ---------------------------------------------------------------------------
# Parameters (deterministic, synthetic); weights stacked over layers, bf16 for MXU
# ---------------------------------------------------------------------------
def init_params(key):
    ks = iter(jax.random.split(key, 24))

    def nrm(shape, scale=0.02):
        return (scale * jax.random.normal(next(ks), shape)).astype(jnp.float32)

    inv_sqrt_dh = 1.0 / math.sqrt(DH)
    wq = nrm((NUM_LAYERS, H, H))
    wk = nrm((NUM_LAYERS, H, H))
    wv = nrm((NUM_LAYERS, H, H))
    bq = nrm((NUM_LAYERS, 1, H))
    bk = nrm((NUM_LAYERS, 1, H))
    bv = nrm((NUM_LAYERS, 1, H))

    bqkv = jnp.concatenate([bq * inv_sqrt_dh, bk, bv], axis=-1)   # (L, 1, 3H)
    bo = nrm((NUM_LAYERS, 1, H))
    b1 = nrm((NUM_LAYERS, 1, INTER))
    b2 = nrm((NUM_LAYERS, 1, H))
    ln1_g = jnp.ones((NUM_LAYERS, 1, H), jnp.float32)
    ln1_b = jnp.zeros((NUM_LAYERS, 1, H), jnp.float32)
    ln2_g = jnp.ones((NUM_LAYERS, 1, H), jnp.float32)
    ln2_b = jnp.zeros((NUM_LAYERS, 1, H), jnp.float32)

    def pad_w(x):
        return jnp.pad(x, ((0, 0), (0, 0), (0, VEC_W - x.shape[-1])))

    # packed per-layer 1-row vectors: 8 rows, lane width padded to VEC_W
    vecs = jnp.concatenate(
        [pad_w(bqkv), pad_w(b1), pad_w(bo), pad_w(ln1_g), pad_w(ln1_b),
         pad_w(b2), pad_w(ln2_g), pad_w(ln2_b)], axis=1)          # (L, 8, VEC_W)

    return {
        'word_emb': nrm((VOCAB, H)),
        'pos_emb': nrm((MAX_POS, H)),
        'type_emb': nrm((2, H)),
        'emb_ln': jnp.concatenate([jnp.ones((1, H), jnp.float32),
                                   jnp.zeros((1, H), jnp.float32)], axis=0),
        # fused QKV; query part pre-scaled by 1/sqrt(DH); bf16 matmul operands
        'wqkv': jnp.concatenate([wq * inv_sqrt_dh, wk, wv], axis=-1).astype(jnp.bfloat16),
        'wo': nrm((NUM_LAYERS, H, H)).astype(jnp.bfloat16),
        'w1': nrm((NUM_LAYERS, H, INTER)).astype(jnp.bfloat16),
        'w2': nrm((NUM_LAYERS, INTER, H)).astype(jnp.bfloat16),
        'vecs': vecs,
        'pool_w': nrm((H, H)).astype(jnp.bfloat16),
        'pool_b': nrm((1, H)),
    }


# ---------------------------------------------------------------------------
# Full forward (mirrors ChineseBertEncoder.forward)
# ---------------------------------------------------------------------------
def chinese_bert_encoder_forward(params, input_ids, attention_mask=None, entity_mask=None):
    if attention_mask is None:
        attention_mask = jnp.ones_like(input_ids)
    b, s = input_ids.shape

    # Embedding gathers are glue (stay in JAX); LayerNorm runs inside the kernel.
    we = params['word_emb'][input_ids]                      # (B, S, H)
    pe = params['pos_emb'][:s][None, :, :]                  # (1, S, H)
    te = params['type_emb'][0][None, None, :]               # token_type_ids == 0
    emb = (we + pe + te).astype(jnp.float32).reshape(b * s, H)   # fold batch into rows

    # Block-diagonal additive attention mask over the folded batch:
    # -1e9 for cross-sequence keys and for keys with attention_mask == 0.
    am = attention_mask.astype(jnp.float32)                 # (B, S)
    same_seq = jnp.kron(jnp.eye(b, dtype=jnp.float32),
                        jnp.ones((s, s), jnp.float32))      # (BS, BS)
    valid = same_seq * am.reshape(b * s)[None, :]
    abias = (1.0 - valid) * (-1e9)

    # Entity mean-pooling matrix: row 2b = head mask/count, row 2b+1 = tail,
    # placed block-diagonally over the folded rows.
    em = entity_mask if entity_mask is not None else jnp.zeros_like(input_ids)
    hmask = (em == 1).astype(jnp.float32)                   # (B, S)
    tmask = (em == 2).astype(jnp.float32)
    hcnt = jnp.maximum(jnp.sum(hmask, axis=-1, keepdims=True), 1.0)
    tcnt = jnp.maximum(jnp.sum(tmask, axis=-1, keepdims=True), 1.0)
    rows = jnp.stack([hmask / hcnt, tmask / tcnt], axis=1)  # (B, 2, S)
    eye = jnp.eye(b, dtype=jnp.float32)
    pool_mat = (eye[:, None, :, None] * rows[:, :, None, :]
                ).reshape(2 * b, b * s).astype(jnp.bfloat16)

    # CLS-row one-hot selector (row b picks folded row b*S).
    cls_sel = (jnp.arange(b * s)[None, :] ==
               (jnp.arange(b) * s)[:, None]).astype(jnp.bfloat16)

    pooled, ent = _encoder_pallas(emb, abias, pool_mat, cls_sel, params)
    if entity_mask is None:
        return pooled, pooled
    entity_repr = ent.reshape(b, 2 * H)                     # (B, 2H) = [head ; tail]
    return pooled, entity_repr


# ---------------------------------------------------------------------------
# Main
# ---------------------------------------------------------------------------
if __name__ == "__main__":
    key = jax.random.PRNGKey(0)
    pkey, ikey = jax.random.split(key)

    params = init_params(pkey)
    input_ids = jax.random.randint(ikey, (B, S), 0, VOCAB, dtype=jnp.int32)
    attention_mask = jnp.array([[1, 1, 1, 1, 1, 1, 1, 1],
                                [1, 1, 1, 1, 1, 1, 0, 0]], dtype=jnp.int32)
    entity_mask = jnp.array([[0, 1, 1, 0, 2, 0, 0, 0],
                             [0, 0, 1, 0, 0, 2, 2, 0]], dtype=jnp.int32)

    pooled, entity_repr = chinese_bert_encoder_forward(
        params, input_ids, attention_mask=attention_mask, entity_mask=entity_mask)
    jax.block_until_ready((pooled, entity_repr))

    assert pooled.shape == (B, H)
    assert entity_repr.shape == (B, 2 * H)
    assert bool(jnp.all(jnp.isfinite(pooled))) and bool(jnp.all(jnp.isfinite(entity_repr)))
    print("KERNEL_OK")
</pallas_src>

<mosaic_0001>
module attributes {stable_mosaic.version = 11 : i64} {
  func.func @_encoder_kernel(%arg0: i32, %arg1: memref<16x128xf32, #tpu.memory_space<vmem>>, %arg2: memref<16x16xf32, #tpu.memory_space<vmem>>, %arg3: memref<4x16xbf16, #tpu.memory_space<vmem>>, %arg4: memref<2x16xbf16, #tpu.memory_space<vmem>>, %arg5: memref<2x128xf32, #tpu.memory_space<vmem>>, %arg6: memref<2x128x384xbf16, #tpu.memory_space<vmem>>, %arg7: memref<2x128x128xbf16, #tpu.memory_space<vmem>>, %arg8: memref<2x128x512xbf16, #tpu.memory_space<vmem>>, %arg9: memref<2x512x128xbf16, #tpu.memory_space<vmem>>, %arg10: memref<2x8x512xf32, #tpu.memory_space<vmem>>, %arg11: memref<128x128xbf16, #tpu.memory_space<vmem>>, %arg12: memref<1x128xf32, #tpu.memory_space<vmem>>, %arg13: memref<2x128xf32, #tpu.memory_space<vmem>>, %arg14: memref<4x128xf32, #tpu.memory_space<vmem>>, %arg15: memref<16x128xf32, #tpu.memory_space<vmem>>) attributes {dimension_semantics = [#tpu.dimension_semantics<arbitrary>], iteration_bounds = array<i64: 2>, scalar_prefetch = 0 : i64, scratch_operands = 1 : i64, tpu.core_type = #tpu.core_type<tc>, window_params = [{pipeline_mode = #tpu.pipeline_mode<synchronous>, transform_indices = @transform_0, window_bounds = array<i64: 16, 128>}, {pipeline_mode = #tpu.pipeline_mode<synchronous>, transform_indices = @transform_1, window_bounds = array<i64: 16, 16>}, {pipeline_mode = #tpu.pipeline_mode<synchronous>, transform_indices = @transform_2, window_bounds = array<i64: 4, 16>}, {pipeline_mode = #tpu.pipeline_mode<synchronous>, transform_indices = @transform_3, window_bounds = array<i64: 2, 16>}, {pipeline_mode = #tpu.pipeline_mode<synchronous>, transform_indices = @transform_4, window_bounds = array<i64: 2, 128>}, {pipeline_mode = #tpu.pipeline_mode<synchronous>, transform_indices = @transform_5, window_bounds = array<i64: 2, 128, 384>}, {pipeline_mode = #tpu.pipeline_mode<synchronous>, transform_indices = @transform_6, window_bounds = array<i64: 2, 128, 128>}, {pipeline_mode = #tpu.pipeline_mode<synchronous>, transform_indices = @transform_7, window_bounds = array<i64: 2, 128, 512>}, {pipeline_mode = #tpu.pipeline_mode<synchronous>, transform_indices = @transform_8, window_bounds = array<i64: 2, 512, 128>}, {pipeline_mode = #tpu.pipeline_mode<synchronous>, transform_indices = @transform_9, window_bounds = array<i64: 2, 8, 512>}, {pipeline_mode = #tpu.pipeline_mode<synchronous>, transform_indices = @transform_10, window_bounds = array<i64: 128, 128>}, {pipeline_mode = #tpu.pipeline_mode<synchronous>, transform_indices = @transform_11, window_bounds = array<i64: 1, 128>}, {pipeline_mode = #tpu.pipeline_mode<synchronous>, transform_indices = @transform_12, window_bounds = array<i64: 2, 128>}, {pipeline_mode = #tpu.pipeline_mode<synchronous>, transform_indices = @transform_13, window_bounds = array<i64: 4, 128>}]} {
    %c0_i32 = arith.constant 0 : i32
    %0 = arith.cmpi eq, %arg0, %c0_i32 : i32
    %1 = arith.extui %0 : i1 to i32
    %c0_i32_0 = arith.constant 0 : i32
    %2 = arith.cmpi ne, %1, %c0_i32_0 : i32
    scf.if %2 {
      %c0_43 = arith.constant 0 : index
      %c0_44 = arith.constant 0 : index
      %155 = vector.load %arg1[%c0_43, %c0_44] : memref<16x128xf32, #tpu.memory_space<vmem>>, vector<16x128xf32>
      %c0_45 = arith.constant 0 : index
      %c0_46 = arith.constant 0 : index
      %156 = vector.load %arg5[%c0_45, %c0_46] : memref<2x128xf32, #tpu.memory_space<vmem>>, vector<1x128xf32>
      %c1 = arith.constant 1 : index
      %c0_47 = arith.constant 0 : index
      %157 = vector.load %arg5[%c1, %c0_47] : memref<2x128xf32, #tpu.memory_space<vmem>>, vector<1x128xf32>
      %cst_48 = arith.constant dense<0.000000e+00> : vector<16xf32>
      %158 = vector.multi_reduction <add>, %155, %cst_48 [1] : vector<16x128xf32> to vector<16xf32>
      %159 = vector.shape_cast %158 : vector<16xf32> to vector<16x1xf32>
      %cst_49 = arith.constant 1.280000e+02 : f32
      %160 = vector.broadcast %cst_49 : f32 to vector<16x1xf32>
      %161 = arith.divf %159, %160 : vector<16x1xf32>
      %162 = vector.broadcast %161 : vector<16x1xf32> to vector<16x128xf32>
      %163 = arith.subf %155, %162 : vector<16x128xf32>
      %164 = arith.mulf %163, %163 : vector<16x128xf32>
      %cst_50 = arith.constant dense<0.000000e+00> : vector<16xf32>
      %165 = vector.multi_reduction <add>, %164, %cst_50 [1] : vector<16x128xf32> to vector<16xf32>
      %166 = vector.shape_cast %165 : vector<16xf32> to vector<16x1xf32>
      %cst_51 = arith.constant 1.280000e+02 : f32
      %167 = vector.broadcast %cst_51 : f32 to vector<16x1xf32>
      %168 = arith.divf %166, %167 : vector<16x1xf32>
      %169 = vector.broadcast %161 : vector<16x1xf32> to vector<16x128xf32>
      %170 = arith.subf %155, %169 : vector<16x128xf32>
      %cst_52 = arith.constant 9.99999996E-13 : f32
      %171 = vector.broadcast %cst_52 : f32 to vector<16x1xf32>
      %172 = arith.addf %168, %171 : vector<16x1xf32>
      %173 = math.rsqrt %172 : vector<16x1xf32>
      %174 = vector.broadcast %173 : vector<16x1xf32> to vector<16x128xf32>
      %175 = arith.mulf %170, %174 : vector<16x128xf32>
      %176 = vector.broadcast %156 : vector<1x128xf32> to vector<16x128xf32>
      %177 = arith.mulf %175, %176 : vector<16x128xf32>
      %178 = vector.broadcast %157 : vector<1x128xf32> to vector<16x128xf32>
      %179 = arith.addf %177, %178 : vector<16x128xf32>
      %c0_53 = arith.constant 0 : index
      %c0_54 = arith.constant 0 : index
      %180 = vector.load %arg15[%c0_53, %c0_54] : memref<16x128xf32, #tpu.memory_space<vmem>>, vector<16x128xf32>
      tpu.vector_store %arg15[%c0_53, %c0_54], %179 {strides = array<i32>} : memref<16x128xf32, #tpu.memory_space<vmem>>, vector<16x128xf32>,
    } else {
    }
    %c0 = arith.constant 0 : index
    %c0_1 = arith.constant 0 : index
    %3 = vector.load %arg15[%c0, %c0_1] : memref<16x128xf32, #tpu.memory_space<vmem>>, vector<16x128xf32>
    %4 = arith.truncf %3 : vector<16x128xf32> to vector<16x128xbf16>
    %5 = arith.index_cast %arg0 : i32 to index
    %c0_2 = arith.constant 0 : index
    %c0_3 = arith.constant 0 : index
    %6 = vector.load %arg10[%5, %c0_2, %c0_3] : memref<2x8x512xf32, #tpu.memory_space<vmem>>, vector<1x8x512xf32>
    %7 = vector.shape_cast %6 : vector<1x8x512xf32> to vector<8x512xf32>
    %8 = vector.extract_strided_slice %7 {offsets = [0, 0], sizes = [1, 384], strides = [1, 1]} : vector<8x512xf32> to vector<1x384xf32>
    %9 = vector.extract_strided_slice %7 {offsets = [1, 0], sizes = [1, 512], strides = [1, 1]} : vector<8x512xf32> to vector<1x512xf32>
    %10 = vector.extract_strided_slice %7 {offsets = [2, 0], sizes = [1, 128], strides = [1, 1]} : vector<8x512xf32> to vector<1x128xf32>
    %11 = vector.extract_strided_slice %7 {offsets = [3, 0], sizes = [1, 128], strides = [1, 1]} : vector<8x512xf32> to vector<1x128xf32>
    %12 = vector.extract_strided_slice %7 {offsets = [4, 0], sizes = [1, 128], strides = [1, 1]} : vector<8x512xf32> to vector<1x128xf32>
    %13 = vector.extract_strided_slice %7 {offsets = [5, 0], sizes = [1, 128], strides = [1, 1]} : vector<8x512xf32> to vector<1x128xf32>
    %14 = vector.extract_strided_slice %7 {offsets = [6, 0], sizes = [1, 128], strides = [1, 1]} : vector<8x512xf32> to vector<1x128xf32>
    %15 = vector.extract_strided_slice %7 {offsets = [7, 0], sizes = [1, 128], strides = [1, 1]} : vector<8x512xf32> to vector<1x128xf32>
    %16 = arith.index_cast %arg0 : i32 to index
    %c0_4 = arith.constant 0 : index
    %c0_5 = arith.constant 0 : index
    %17 = vector.load %arg6[%16, %c0_4, %c0_5] : memref<2x128x384xbf16, #tpu.memory_space<vmem>>, vector<1x128x384xbf16>
    %18 = vector.shape_cast %17 : vector<1x128x384xbf16> to vector<128x384xbf16>
    %cst = arith.constant dense<0.000000e+00> : vector<16x384xf32>
    %19 = tpu.matmul %4, %18, %cst {dimension_numbers = #tpu.dot_dimension_numbers<[1], [0], [0], [1], [0, 0, 1, 1], [], []>} : vector<16x128xbf16>, vector<128x384xbf16>, vector<16x384xf32> -> vector<16x384xf32>
    %20 = vector.broadcast %8 : vector<1x384xf32> to vector<16x384xf32>
    %21 = arith.addf %19, %20 : vector<16x384xf32>
    %22 = vector.extract_strided_slice %21 {offsets = [0, 0], sizes = [16, 128], strides = [1, 1]} : vector<16x384xf32> to vector<16x128xf32>
    %23 = vector.extract_strided_slice %21 {offsets = [0, 128], sizes = [16, 128], strides = [1, 1]} : vector<16x384xf32> to vector<16x128xf32>
    %24 = vector.extract_strided_slice %21 {offsets = [0, 256], sizes = [16, 128], strides = [1, 1]} : vector<16x384xf32> to vector<16x128xf32>
    %c0_6 = arith.constant 0 : index
    %c0_7 = arith.constant 0 : index
    %25 = vector.load %arg2[%c0_6, %c0_7] : memref<16x16xf32, #tpu.memory_space<vmem>>, vector<16x16xf32>
    %26 = arith.index_cast %arg0 : i32 to index
    %c0_8 = arith.constant 0 : index
    %c0_9 = arith.constant 0 : index
    %27 = vector.load %arg7[%26, %c0_8, %c0_9] : memref<2x128x128xbf16, #tpu.memory_space<vmem>>, vector<1x128x128xbf16>
    %28 = vector.shape_cast %27 : vector<1x128x128xbf16> to vector<128x128xbf16>
    %29 = vector.extract_strided_slice %22 {offsets = [0, 0], sizes = [16, 64], strides = [1, 1]} : vector<16x128xf32> to vector<16x64xf32>
    %30 = arith.truncf %29 : vector<16x64xf32> to vector<16x64xbf16>
    %31 = vector.extract_strided_slice %23 {offsets = [0, 0], sizes = [16, 64], strides = [1, 1]} : vector<16x128xf32> to vector<16x64xf32>
    %32 = arith.truncf %31 : vector<16x64xf32> to vector<16x64xbf16>
    %33 = vector.extract_strided_slice %24 {offsets = [0, 0], sizes = [16, 64], strides = [1, 1]} : vector<16x128xf32> to vector<16x64xf32>
    %34 = arith.truncf %33 : vector<16x64xf32> to vector<16x64xbf16>
    %cst_10 = arith.constant dense<0.000000e+00> : vector<16x16xf32>
    %35 = tpu.matmul %30, %32, %cst_10 {dimension_numbers = #tpu.dot_dimension_numbers<[1], [1], [0], [0], [0, 0, 1, 0], [], []>} : vector<16x64xbf16>, vector<16x64xbf16>, vector<16x16xf32> -> vector<16x16xf32>
    %36 = arith.addf %35, %25 : vector<16x16xf32>
    %cst_11 = arith.constant dense<0xFF800000> : vector<16xf32>
    %37 = vector.multi_reduction <maximumf>, %36, %cst_11 [1] : vector<16x16xf32> to vector<16xf32>
    %38 = vector.shape_cast %37 : vector<16xf32> to vector<16x1xf32>
    %39 = vector.broadcast %38 : vector<16x1xf32> to vector<16x16xf32>
    %40 = arith.subf %36, %39 : vector<16x16xf32>
    %41 = math.exp %40 : vector<16x16xf32>
    %cst_12 = arith.constant dense<0.000000e+00> : vector<16xf32>
    %42 = vector.multi_reduction <add>, %41, %cst_12 [1] : vector<16x16xf32> to vector<16xf32>
    %43 = vector.shape_cast %42 : vector<16xf32> to vector<16x1xf32>
    %44 = tpu.reciprocal %43 {approx = true} : vector<16x1xf32> -> vector<16x1xf32>
    %45 = vector.broadcast %44 : vector<16x1xf32> to vector<16x16xf32>
    %46 = arith.mulf %41, %45 : vector<16x16xf32>
    %47 = arith.truncf %46 : vector<16x16xf32> to vector<16x16xbf16>
    %cst_13 = arith.constant dense<0.000000e+00> : vector<16x64xf32>
    %48 = tpu.matmul %47, %34, %cst_13 {dimension_numbers = #tpu.dot_dimension_numbers<[1], [0], [0], [1], [0, 0, 1, 1], [], []>} : vector<16x16xbf16>, vector<16x64xbf16>, vector<16x64xf32> -> vector<16x64xf32>
    %49 = arith.truncf %48 : vector<16x64xf32> to vector<16x64xbf16>
    %50 = vector.extract_strided_slice %28 {offsets = [0, 0], sizes = [64, 128], strides = [1, 1]} : vector<128x128xbf16> to vector<64x128xbf16>
    %cst_14 = arith.constant dense<0.000000e+00> : vector<16x128xf32>
    %51 = tpu.matmul %49, %50, %cst_14 {dimension_numbers = #tpu.dot_dimension_numbers<[1], [0], [0], [1], [0, 0, 1, 1], [], []>} : vector<16x64xbf16>, vector<64x128xbf16>, vector<16x128xf32> -> vector<16x128xf32>
    %52 = vector.broadcast %10 : vector<1x128xf32> to vector<16x128xf32>
    %53 = arith.addf %52, %51 : vector<16x128xf32>
    %54 = vector.extract_strided_slice %22 {offsets = [0, 64], sizes = [16, 64], strides = [1, 1]} : vector<16x128xf32> to vector<16x64xf32>
    %55 = arith.truncf %54 : vector<16x64xf32> to vector<16x64xbf16>
    %56 = vector.extract_strided_slice %23 {offsets = [0, 64], sizes = [16, 64], strides = [1, 1]} : vector<16x128xf32> to vector<16x64xf32>
    %57 = arith.truncf %56 : vector<16x64xf32> to vector<16x64xbf16>
    %58 = vector.extract_strided_slice %24 {offsets = [0, 64], sizes = [16, 64], strides = [1, 1]} : vector<16x128xf32> to vector<16x64xf32>
    %59 = arith.truncf %58 : vector<16x64xf32> to vector<16x64xbf16>
    %cst_15 = arith.constant dense<0.000000e+00> : vector<16x16xf32>
    %60 = tpu.matmul %55, %57, %cst_15 {dimension_numbers = #tpu.dot_dimension_numbers<[1], [1], [0], [0], [0, 0, 1, 0], [], []>} : vector<16x64xbf16>, vector<16x64xbf16>, vector<16x16xf32> -> vector<16x16xf32>
    %61 = arith.addf %60, %25 : vector<16x16xf32>
    %cst_16 = arith.constant dense<0xFF800000> : vector<16xf32>
    %62 = vector.multi_reduction <maximumf>, %61, %cst_16 [1] : vector<16x16xf32> to vector<16xf32>
    %63 = vector.shape_cast %62 : vector<16xf32> to vector<16x1xf32>
    %64 = vector.broadcast %63 : vector<16x1xf32> to vector<16x16xf32>
    %65 = arith.subf %61, %64 : vector<16x16xf32>
    %66 = math.exp %65 : vector<16x16xf32>
    %cst_17 = arith.constant dense<0.000000e+00> : vector<16xf32>
    %67 = vector.multi_reduction <add>, %66, %cst_17 [1] : vector<16x16xf32> to vector<16xf32>
    %68 = vector.shape_cast %67 : vector<16xf32> to vector<16x1xf32>
    %69 = tpu.reciprocal %68 {approx = true} : vector<16x1xf32> -> vector<16x1xf32>
    %70 = vector.broadcast %69 : vector<16x1xf32> to vector<16x16xf32>
    %71 = arith.mulf %66, %70 : vector<16x16xf32>
    %72 = arith.truncf %71 : vector<16x16xf32> to vector<16x16xbf16>
    %cst_18 = arith.constant dense<0.000000e+00> : vector<16x64xf32>
    %73 = tpu.matmul %72, %59, %cst_18 {dimension_numbers = #tpu.dot_dimension_numbers<[1], [0], [0], [1], [0, 0, 1, 1], [], []>} : vector<16x16xbf16>, vector<16x64xbf16>, vector<16x64xf32> -> vector<16x64xf32>
    %74 = arith.truncf %73 : vector<16x64xf32> to vector<16x64xbf16>
    %75 = vector.extract_strided_slice %28 {offsets = [64, 0], sizes = [64, 128], strides = [1, 1]} : vector<128x128xbf16> to vector<64x128xbf16>
    %cst_19 = arith.constant dense<0.000000e+00> : vector<16x128xf32>
    %76 = tpu.matmul %74, %75, %cst_19 {dimension_numbers = #tpu.dot_dimension_numbers<[1], [0], [0], [1], [0, 0, 1, 1], [], []>} : vector<16x64xbf16>, vector<64x128xbf16>, vector<16x128xf32> -> vector<16x128xf32>
    %77 = arith.addf %53, %76 : vector<16x128xf32>
    %78 = arith.addf %3, %77 : vector<16x128xf32>
    %cst_20 = arith.constant dense<0.000000e+00> : vector<16xf32>
    %79 = vector.multi_reduction <add>, %78, %cst_20 [1] : vector<16x128xf32> to vector<16xf32>
    %80 = vector.shape_cast %79 : vector<16xf32> to vector<16x1xf32>
    %cst_21 = arith.constant 1.280000e+02 : f32
    %81 = vector.broadcast %cst_21 : f32 to vector<16x1xf32>
    %82 = arith.divf %80, %81 : vector<16x1xf32>
    %83 = vector.broadcast %82 : vector<16x1xf32> to vector<16x128xf32>
    %84 = arith.subf %78, %83 : vector<16x128xf32>
    %85 = arith.mulf %84, %84 : vector<16x128xf32>
    %cst_22 = arith.constant dense<0.000000e+00> : vector<16xf32>
    %86 = vector.multi_reduction <add>, %85, %cst_22 [1] : vector<16x128xf32> to vector<16xf32>
    %87 = vector.shape_cast %86 : vector<16xf32> to vector<16x1xf32>
    %cst_23 = arith.constant 1.280000e+02 : f32
    %88 = vector.broadcast %cst_23 : f32 to vector<16x1xf32>
    %89 = arith.divf %87, %88 : vector<16x1xf32>
    %90 = vector.broadcast %82 : vector<16x1xf32> to vector<16x128xf32>
    %91 = arith.subf %78, %90 : vector<16x128xf32>
    %cst_24 = arith.constant 9.99999996E-13 : f32
    %92 = vector.broadcast %cst_24 : f32 to vector<16x1xf32>
    %93 = arith.addf %89, %92 : vector<16x1xf32>
    %94 = math.rsqrt %93 : vector<16x1xf32>
    %95 = vector.broadcast %94 : vector<16x1xf32> to vector<16x128xf32>
    %96 = arith.mulf %91, %95 : vector<16x128xf32>
    %97 = vector.broadcast %11 : vector<1x128xf32> to vector<16x128xf32>
    %98 = arith.mulf %96, %97 : vector<16x128xf32>
    %99 = vector.broadcast %12 : vector<1x128xf32> to vector<16x128xf32>
    %100 = arith.addf %98, %99 : vector<16x128xf32>
    %101 = arith.truncf %100 : vector<16x128xf32> to vector<16x128xbf16>
    %102 = arith.index_cast %arg0 : i32 to index
    %c0_25 = arith.constant 0 : index
    %c0_26 = arith.constant 0 : index
    %103 = vector.load %arg8[%102, %c0_25, %c0_26] : memref<2x128x512xbf16, #tpu.memory_space<vmem>>, vector<1x128x512xbf16>
    %104 = vector.shape_cast %103 : vector<1x128x512xbf16> to vector<128x512xbf16>
    %cst_27 = arith.constant dense<0.000000e+00> : vector<16x512xf32>
    %105 = tpu.matmul %101, %104, %cst_27 {dimension_numbers = #tpu.dot_dimension_numbers<[1], [0], [0], [1], [0, 0, 1, 1], [], []>} : vector<16x128xbf16>, vector<128x512xbf16>, vector<16x512xf32> -> vector<16x512xf32>
    %106 = vector.broadcast %9 : vector<1x512xf32> to vector<16x512xf32>
    %107 = arith.addf %105, %106 : vector<16x512xf32>
    %cst_28 = arith.constant 5.000000e-01 : f32
    %108 = vector.broadcast %cst_28 : f32 to vector<16x512xf32>
    %109 = arith.mulf %108, %107 : vector<16x512xf32>
    %cst_29 = arith.constant 4.471500e-02 : f32
    %110 = vector.broadcast %cst_29 : f32 to vector<16x512xf32>
    %111 = arith.mulf %110, %107 : vector<16x512xf32>
    %112 = arith.mulf %111, %107 : vector<16x512xf32>
    %113 = arith.mulf %112, %107 : vector<16x512xf32>
    %114 = arith.addf %107, %113 : vector<16x512xf32>
    %cst_30 = arith.constant 0.797884583 : f32
    %115 = vector.broadcast %cst_30 : f32 to vector<16x512xf32>
    %116 = arith.mulf %115, %114 : vector<16x512xf32>
    %117 = math.tanh %116 : vector<16x512xf32>
    %cst_31 = arith.constant 1.000000e+00 : f32
    %118 = vector.broadcast %cst_31 : f32 to vector<16x512xf32>
    %119 = arith.addf %118, %117 : vector<16x512xf32>
    %120 = arith.mulf %109, %119 : vector<16x512xf32>
    %121 = arith.truncf %120 : vector<16x512xf32> to vector<16x512xbf16>
    %122 = arith.index_cast %arg0 : i32 to index
    %c0_32 = arith.constant 0 : index
    %c0_33 = arith.constant 0 : index
    %123 = vector.load %arg9[%122, %c0_32, %c0_33] : memref<2x512x128xbf16, #tpu.memory_space<vmem>>, vector<1x512x128xbf16>
    %124 = vector.shape_cast %123 : vector<1x512x128xbf16> to vector<512x128xbf16>
    %cst_34 = arith.constant dense<0.000000e+00> : vector<16x128xf32>
    %125 = tpu.matmul %121, %124, %cst_34 {dimension_numbers = #tpu.dot_dimension_numbers<[1], [0], [0], [1], [0, 0, 1, 1], [], []>} : vector<16x512xbf16>, vector<512x128xbf16>, vector<16x128xf32> -> vector<16x128xf32>
    %126 = vector.broadcast %13 : vector<1x128xf32> to vector<16x128xf32>
    %127 = arith.addf %125, %126 : vector<16x128xf32>
    %128 = arith.addf %100, %127 : vector<16x128xf32>
    %cst_35 = arith.constant dense<0.000000e+00> : vector<16xf32>
    %129 = vector.multi_reduction <add>, %128, %cst_35 [1] : vector<16x128xf32> to vector<16xf32>
    %130 = vector.shape_cast %129 : vector<16xf32> to vector<16x1xf32>
    %cst_36 = arith.constant 1.280000e+02 : f32
    %131 = vector.broadcast %cst_36 : f32 to vector<16x1xf32>
    %132 = arith.divf %130, %131 : vector<16x1xf32>
    %133 = vector.broadcast %132 : vector<16x1xf32> to vector<16x128xf32>
    %134 = arith.subf %128, %133 : vector<16x128xf32>
    %135 = arith.mulf %134, %134 : vector<16x128xf32>
    %cst_37 = arith.constant dense<0.000000e+00> : vector<16xf32>
    %136 = vector.multi_reduction <add>, %135, %cst_37 [1] : vector<16x128xf32> to vector<16xf32>
    %137 = vector.shape_cast %136 : vector<16xf32> to vector<16x1xf32>
    %cst_38 = arith.constant 1.280000e+02 : f32
    %138 = vector.broadcast %cst_38 : f32 to vector<16x1xf32>
    %139 = arith.divf %137, %138 : vector<16x1xf32>
    %140 = vector.broadcast %132 : vector<16x1xf32> to vector<16x128xf32>
    %141 = arith.subf %128, %140 : vector<16x128xf32>
    %cst_39 = arith.constant 9.99999996E-13 : f32
    %142 = vector.broadcast %cst_39 : f32 to vector<16x1xf32>
    %143 = arith.addf %139, %142 : vector<16x1xf32>
    %144 = math.rsqrt %143 : vector<16x1xf32>
    %145 = vector.broadcast %144 : vector<16x1xf32> to vector<16x128xf32>
    %146 = arith.mulf %141, %145 : vector<16x128xf32>
    %147 = vector.broadcast %14 : vector<1x128xf32> to vector<16x128xf32>
    %148 = arith.mulf %146, %147 : vector<16x128xf32>
    %149 = vector.broadcast %15 : vector<1x128xf32> to vector<16x128xf32>
    %150 = arith.addf %148, %149 : vector<16x128xf32>
    %c0_40 = arith.constant 0 : index
    %c0_41 = arith.constant 0 : index
    %151 = vector.load %arg15[%c0_40, %c0_41] : memref<16x128xf32, #tpu.memory_space<vmem>>, vector<16x128xf32>
    tpu.vector_store %arg15[%c0_40, %c0_41], %150 {strides = array<i32>} : memref<16x128xf32, #tpu.memory_space<vmem>>, vector<16x128xf32>,
    %c1_i32 = arith.constant 1 : i32
    %152 = arith.cmpi eq, %arg0, %c1_i32 : i32
    %153 = arith.extui %152 : i1 to i32
    %c0_i32_42 = arith.constant 0 : i32
    %154 = arith.cmpi ne, %153, %c0_i32_42 : i32
    scf.if %154 {
      %155 = arith.truncf %150 : vector<16x128xf32> to vector<16x128xbf16>
      %c0_43 = arith.constant 0 : index
      %c0_44 = arith.constant 0 : index
      %156 = vector.load %arg3[%c0_43, %c0_44] : memref<4x16xbf16, #tpu.memory_space<vmem>>, vector<4x16xbf16>
      %cst_45 = arith.constant dense<0.000000e+00> : vector<4x128xf32>
      %157 = tpu.matmul %156, %155, %cst_45 {dimension_numbers = #tpu.dot_dimension_numbers<[1], [0], [0], [1], [0, 0, 1, 1], [], []>} : vector<4x16xbf16>, vector<16x128xbf16>, vector<4x128xf32> -> vector<4x128xf32>
      %c0_46 = arith.constant 0 : index
      %c0_47 = arith.constant 0 : index
      %158 = vector.load %arg14[%c0_46, %c0_47] : memref<4x128xf32, #tpu.memory_space<vmem>>, vector<4x128xf32>
      tpu.vector_store %arg14[%c0_46, %c0_47], %157 {strides = array<i32>} : memref<4x128xf32, #tpu.memory_space<vmem>>, vector<4x128xf32>,
      %c0_48 = arith.constant 0 : index
      %c0_49 = arith.constant 0 : index
      %159 = vector.load %arg4[%c0_48, %c0_49] : memref<2x16xbf16, #tpu.memory_space<vmem>>, vector<2x16xbf16>
      %cst_50 = arith.constant dense<0.000000e+00> : vector<2x128xf32>
      %160 = tpu.matmul %159, %155, %cst_50 {dimension_numbers = #tpu.dot_dimension_numbers<[1], [0], [0], [1], [0, 0, 1, 1], [], []>} : vector<2x16xbf16>, vector<16x128xbf16>, vector<2x128xf32> -> vector<2x128xf32>
      %161 = arith.truncf %160 : vector<2x128xf32> to vector<2x128xbf16>
      %c0_51 = arith.constant 0 : index
      %c0_52 = arith.constant 0 : index
      %162 = vector.load %arg11[%c0_51, %c0_52] : memref<128x128xbf16, #tpu.memory_space<vmem>>, vector<128x128xbf16>
      %cst_53 = arith.constant dense<0.000000e+00> : vector<2x128xf32>
      %163 = tpu.matmul %161, %162, %cst_53 {dimension_numbers = #tpu.dot_dimension_numbers<[1], [0], [0], [1], [0, 0, 1, 1], [], []>} : vector<2x128xbf16>, vector<128x128xbf16>, vector<2x128xf32> -> vector<2x128xf32>
      %c0_54 = arith.constant 0 : index
      %c0_55 = arith.constant 0 : index
      %164 = vector.load %arg12[%c0_54, %c0_55] : memref<1x128xf32, #tpu.memory_space<vmem>>, vector<1x128xf32>
      %165 = vector.broadcast %164 : vector<1x128xf32> to vector<2x128xf32>
      %166 = arith.addf %163, %165 : vector<2x128xf32>
      %167 = math.tanh %166 : vector<2x128xf32>
      %c0_56 = arith.constant 0 : index
      %c0_57 = arith.constant 0 : index
      %168 = vector.load %arg13[%c0_56, %c0_57] : memref<2x128xf32, #tpu.memory_space<vmem>>, vector<2x128xf32>
      tpu.vector_store %arg13[%c0_56, %c0_57], %167 {strides = array<i32>} : memref<2x128xf32, #tpu.memory_space<vmem>>, vector<2x128xf32>,
    } else {
    }
    return
  }
  func.func @transform_0(%arg0: i32) -> (i32, i32) {
    %c0_i32 = arith.constant 0 : i32
    %c0_i32_0 = arith.constant 0 : i32
    %c0_i32_1 = arith.constant 0 : i32
    return %c0_i32, %c0_i32_0 : i32, i32
  }
  func.func @transform_1(%arg0: i32) -> (i32, i32) {
    %c0_i32 = arith.constant 0 : i32
    %c0_i32_0 = arith.constant 0 : i32
    %c0_i32_1 = arith.constant 0 : i32
    return %c0_i32, %c0_i32_0 : i32, i32
  }
  func.func @transform_2(%arg0: i32) -> (i32, i32) {
    %c0_i32 = arith.constant 0 : i32
    %c0_i32_0 = arith.constant 0 : i32
    %c0_i32_1 = arith.constant 0 : i32
    return %c0_i32, %c0_i32_0 : i32, i32
  }
  func.func @transform_3(%arg0: i32) -> (i32, i32) {
    %c0_i32 = arith.constant 0 : i32
    %c0_i32_0 = arith.constant 0 : i32
    %c0_i32_1 = arith.constant 0 : i32
    return %c0_i32, %c0_i32_0 : i32, i32
  }
  func.func @transform_4(%arg0: i32) -> (i32, i32) {
    %c0_i32 = arith.constant 0 : i32
    %c0_i32_0 = arith.constant 0 : i32
    %c0_i32_1 = arith.constant 0 : i32
    return %c0_i32, %c0_i32_0 : i32, i32
  }
  func.func @transform_5(%arg0: i32) -> (i32, i32, i32) {
    %c0_i32 = arith.constant 0 : i32
    %c0_i32_0 = arith.constant 0 : i32
    %c0_i32_1 = arith.constant 0 : i32
    %c0_i32_2 = arith.constant 0 : i32
    return %c0_i32, %c0_i32_0, %c0_i32_1 : i32, i32, i32
  }
  func.func @transform_6(%arg0: i32) -> (i32, i32, i32) {
    %c0_i32 = arith.constant 0 : i32
    %c0_i32_0 = arith.constant 0 : i32
    %c0_i32_1 = arith.constant 0 : i32
    %c0_i32_2 = arith.constant 0 : i32
    return %c0_i32, %c0_i32_0, %c0_i32_1 : i32, i32, i32
  }
  func.func @transform_7(%arg0: i32) -> (i32, i32, i32) {
    %c0_i32 = arith.constant 0 : i32
    %c0_i32_0 = arith.constant 0 : i32
    %c0_i32_1 = arith.constant 0 : i32
    %c0_i32_2 = arith.constant 0 : i32
    return %c0_i32, %c0_i32_0, %c0_i32_1 : i32, i32, i32
  }
  func.func @transform_8(%arg0: i32) -> (i32, i32, i32) {
    %c0_i32 = arith.constant 0 : i32
    %c0_i32_0 = arith.constant 0 : i32
    %c0_i32_1 = arith.constant 0 : i32
    %c0_i32_2 = arith.constant 0 : i32
    return %c0_i32, %c0_i32_0, %c0_i32_1 : i32, i32, i32
  }
  func.func @transform_9(%arg0: i32) -> (i32, i32, i32) {
    %c0_i32 = arith.constant 0 : i32
    %c0_i32_0 = arith.constant 0 : i32
    %c0_i32_1 = arith.constant 0 : i32
    %c0_i32_2 = arith.constant 0 : i32
    return %c0_i32, %c0_i32_0, %c0_i32_1 : i32, i32, i32
  }
  func.func @transform_10(%arg0: i32) -> (i32, i32) {
    %c0_i32 = arith.constant 0 : i32
    %c0_i32_0 = arith.constant 0 : i32
    %c0_i32_1 = arith.constant 0 : i32
    return %c0_i32, %c0_i32_0 : i32, i32
  }
  func.func @transform_11(%arg0: i32) -> (i32, i32) {
    %c0_i32 = arith.constant 0 : i32
    %c0_i32_0 = arith.constant 0 : i32
    %c0_i32_1 = arith.constant 0 : i32
    return %c0_i32, %c0_i32_0 : i32, i32
  }
  func.func @transform_12(%arg0: i32) -> (i32, i32) {
    %c0_i32 = arith.constant 0 : i32
    %c0_i32_0 = arith.constant 0 : i32
    %c0_i32_1 = arith.constant 0 : i32
    return %c0_i32, %c0_i32_0 : i32, i32
  }
  func.func @transform_13(%arg0: i32) -> (i32, i32) {
    %c0_i32 = arith.constant 0 : i32
    %c0_i32_0 = arith.constant 0 : i32
    %c0_i32_1 = arith.constant 0 : i32
    return %c0_i32, %c0_i32_0 : i32, i32
  }
}

</mosaic_0001>

<llo_original>
// kernel: tpu_custom_call.1
$region0: #{tpu_custom_call.1}
  #allocation0 [shape = 'u32[]', space=smem, size = 0x4, offset = 0x4, fixed_abs, tag = 'smem constant byte address 0x4 - core index']
  #allocation1 [shape = 'u32[144,128]{1,0:T(1,128)}', space=vmem, size = 0x12000, scoped, tag = 'internal scratch']
  #allocation2 [shape = 'f32[16,128]{1,0:T(8,128)}', space=vmem, size = 0x2000, scoped, tag = 'scratch operand']
  %s0 = inlined_call_operand.hbm [shape: f32[16,128], index: 0, kind: input, shape index: {}]
  %s1 = inlined_call_operand.hbm [shape: f32[16,16], index: 1, kind: input, shape index: {}]
  %s2 = inlined_call_operand.vmem [shape: bf16[4,16], index: 2, kind: input, shape index: {}]
  %s3 = inlined_call_operand.vmem [shape: bf16[2,16], index: 3, kind: input, shape index: {}]
  %s4 = inlined_call_operand.vmem [shape: f32[2,128], index: 4, kind: input, shape index: {}]
  %s5 = inlined_call_operand.hbm [shape: bf16[2,128,384], index: 5, kind: input, shape index: {}]
  %s6 = inlined_call_operand.hbm [shape: bf16[2,128,128], index: 6, kind: input, shape index: {}]
  %s7 = inlined_call_operand.hbm [shape: bf16[2,128,512], index: 7, kind: input, shape index: {}]
  %s8 = inlined_call_operand.hbm [shape: bf16[2,512,128], index: 8, kind: input, shape index: {}]
  %s9 = inlined_call_operand.hbm [shape: f32[2,8,512], index: 9, kind: input, shape index: {}]
  %s10 = inlined_call_operand.hbm [shape: bf16[128,128], index: 10, kind: input, shape index: {}]
  %s11 = inlined_call_operand.vmem [shape: f32[1,128], index: 11, kind: input, shape index: {}]
  %s12 = inlined_call_operand.hbm [shape: f32[2,128], index: 12, kind: output, shape index: {0}]
  %s13 = inlined_call_operand.hbm [shape: f32[4,128], index: 13, kind: output, shape index: {1}]
  %14 = xla_tuple %s12, %s13
  %s15 = sld [smem:[#allocation0]]
  $region129: #{tpu_custom_call.1} parent=0
    _
  %s17 = ssub.s32 1, %s15
  %s18 = scalar_select 0, %s17, %s15
  $region1: #{tpu_custom_call.1} parent=0
    #allocation3 [shape = 'u8[8192]{0}', space=vmem, size = 0x2000, scoped, tag = 'input window, operand 0, single buffered']
    #allocation4 [shape = 's32[2]{0}', space=sflag, size = 0x8, scoped, tag = 'scoped memory for tpu_custom_call.1']
    #allocation5 [shape = 's32[2]{0}', space=sflag, size = 0x8, scoped, tag = 'scoped memory for tpu_custom_call.1']
    #allocation6 [shape = 'u8[8192]{0}', space=vmem, size = 0x2000, scoped, tag = 'input window, operand 1, single buffered']
    #allocation7 [shape = 's32[1]{0}', space=sflag, size = 0x4, scoped, tag = 'scoped memory for tpu_custom_call.1']
    #allocation8 [shape = 'u8[196608]{0}', space=vmem, size = 0x30000, scoped, tag = 'input window, operand 5, single buffered']
    #allocation9 [shape = 'u8[65536]{0}', space=vmem, size = 0x10000, scoped, tag = 'input window, operand 6, single buffered']
    #allocation10 [shape = 's32[1]{0}', space=sflag, size = 0x4, scoped, tag = 'scoped memory for tpu_custom_call.1']
    #allocation11 [shape = 'u8[262144]{0}', space=vmem, size = 0x40000, scoped, tag = 'input window, operand 7, single buffered']
    #allocation12 [shape = 'u8[262144]{0}', space=vmem, size = 0x40000, scoped, tag = 'input window, operand 8, single buffered']
    #allocation13 [shape = 's32[1]{0}', space=sflag, size = 0x4, scoped, tag = 'scoped memory for tpu_custom_call.1']
    #allocation14 [shape = 'u8[32768]{0}', space=vmem, size = 0x8000, scoped, tag = 'input window, operand 9, single buffered']
    #allocation15 [shape = 'u8[32768]{0}', space=vmem, size = 0x8000, scoped, tag = 'input window, operand 10, single buffered']
    #allocation16 [shape = 's32[1]{0}', space=sflag, size = 0x4, scoped, tag = 'scoped memory for tpu_custom_call.1']
    #allocation17 [shape = 'u8[1024]{0}', space=vmem, size = 0x400, scoped, tag = 'output window, operand 0, single buffered']
    #allocation18 [shape = 'u8[2048]{0}', space=vmem, size = 0x800, scoped, tag = 'output window, operand 1, single buffered']
    #allocation19 [shape = 's32[1]{0}', space=sflag, size = 0x4, scoped, tag = 'scoped memory for tpu_custom_call.1']
    %19 = vsyncpa [#allocation4], 0
    %20 = vsyncpa [#allocation7], 0
    %21 = vsyncpa [#allocation10], 0
    %22 = vsyncpa [#allocation13], 0
    %23 = vsyncpa [#allocation16], 0
    %24 = vsyncpa [#allocation5], 0
    %25 = vsyncpa [#allocation19], 0
    loop: start=0, step=1, limit=4
    $region2: #{tpu_custom_call.1} parent=1 // loop_pre_header
      _
    $region3: #{tpu_custom_call.1} parent=1 // loop_header
      %s27 = sphi 0, %s31
      %p28 = scmp.ge.s32.totalorder %s27, 4
      %s35 = sphi 0, %s35
      %s37 = sphi 0, %s35
      %s38 = sphi 0, %s37
      %s52 = sphi 0, %s38
      %s56 = sphi 0, %s56
      %s58 = sphi 0, %s56
      %s59 = sphi 0, %s58
      %s73 = sphi 0, %s59
      %s77 = sphi 0, %s77
      %s79 = sphi 0, %s77
      %s80 = sphi 0, %s79
      %s94 = sphi 0, %s80
      %s98 = sphi 0, %s98
      %s100 = sphi 0, %s98
      %s101 = sphi 0, %s100
      %s115 = sphi 0, %s101
      %s119 = sphi 0, %s119
      %s121 = sphi 0, %s119
      %s122 = sphi 0, %s121
      %s136 = sphi 0, %s122
      %s140 = sphi 0, %s140
      %s142 = sphi 0, %s140
      %s143 = sphi 0, %s142
      %s157 = sphi 0, %s143
      %s161 = sphi 0, %s161
      %s163 = sphi 0, %s161
      %s164 = sphi 0, %s163
      %s178 = sphi 0, %s164
      %s182 = sphi 0, %s182
      %s184 = sphi 0, %s182
      %s185 = sphi 0, %s184
      %s199 = sphi 0, %s185
      %s203 = sphi 0, %s203
      %s205 = sphi 0, %s203
      %s206 = sphi 0, %s205
      %s220 = sphi 0, %s206
      %s224 = sphi 0, %s224
      %s226 = sphi 0, %s224
      %s227 = sphi 0, %s226
      %s241 = sphi 0, %s227
      %s245 = sphi 0, %s245
      %s247 = sphi 0, %s245
      %s248 = sphi 0, %s247
      %s262 = sphi 0, %s248
      %s266 = sphi 0, %s266
      %s268 = sphi 0, %s266
      %s269 = sphi 0, %s268
      %s283 = sphi 0, %s269
      %s287 = sphi 0, %s287
      %s289 = sphi 0, %s287
      %s290 = sphi 0, %s289
      %s304 = sphi 0, %s290
      %s308 = sphi 0, %s308
      %s310 = sphi 0, %s308
      %s311 = sphi 0, %s310
      %s325 = sphi 0, %s311
    $region4: #{tpu_custom_call.1} parent=1 // loop_header_branch
      %30 = sbr.rel (%p28) target = $region8
    $region5: #{tpu_custom_call.1} parent=1 // loop_body
      %s32 = ssub.s32 %s27, 1
      %s33 = ssub.s32 %s27, 2
      %s34 = sadd.s32 %s27, 1
      %s36 = sadd.s32 %s35, 1
      %p39 = scmp.eq.s32.totalorder %s27, 1
      %p40 = scmp.ne.s32.totalorder %s35, %s37
      %p41 = scmp.eq.s32.totalorder %s27, 0
      %p42 = por %p40, %p41
      %p43 = scmp.ne.s32.totalorder %s35, %s37
      %p44 = scmp.eq.s32.totalorder %s32, 1
      %p45 = por %p43, %p44
      %p46 = scmp.ne.s32.totalorder %s37, %s38
      %p47 = scmp.eq.s32.totalorder %s32, 0
      %p48 = por %p46, %p47
      %p49 = scmp.ne.s32.totalorder %s37, %s38
      %p50 = scmp.eq.s32.totalorder %s33, 1
      %p51 = por %p49, %p50
      %p53 = scmp.ne.s32.totalorder %s38, %s52
      %p54 = scmp.eq.s32.totalorder %s33, 0
      %p55 = por %p53, %p54
      %s57 = sadd.s32 %s56, 1
      %p60 = scmp.eq.s32.totalorder %s27, 1
      %p61 = scmp.ne.s32.totalorder %s56, %s58
      %p62 = scmp.eq.s32.totalorder %s27, 0
      %p63 = por %p61, %p62
      %p64 = scmp.ne.s32.totalorder %s56, %s58
      %p65 = scmp.eq.s32.totalorder %s32, 1
      %p66 = por %p64, %p65
      %p67 = scmp.ne.s32.totalorder %s58, %s59
      %p68 = scmp.eq.s32.totalorder %s32, 0
      %p69 = por %p67, %p68
      %p70 = scmp.ne.s32.totalorder %s58, %s59
      %p71 = scmp.eq.s32.totalorder %s33, 1
      %p72 = por %p70, %p71
      %p74 = scmp.ne.s32.totalorder %s59, %s73
      %p75 = scmp.eq.s32.totalorder %s33, 0
      %p76 = por %p74, %p75
      %s78 = sadd.s32 %s77, 1
      %p81 = scmp.eq.s32.totalorder %s27, 1
      %p82 = scmp.ne.s32.totalorder %s77, %s79
      %p83 = scmp.eq.s32.totalorder %s27, 0
      %p84 = por %p82, %p83
      %p85 = scmp.ne.s32.totalorder %s77, %s79
      %p86 = scmp.eq.s32.totalorder %s32, 1
      %p87 = por %p85, %p86
      %p88 = scmp.ne.s32.totalorder %s79, %s80
      %p89 = scmp.eq.s32.totalorder %s32, 0
      %p90 = por %p88, %p89
      %p91 = scmp.ne.s32.totalorder %s79, %s80
      %p92 = scmp.eq.s32.totalorder %s33, 1
      %p93 = por %p91, %p92
      %p95 = scmp.ne.s32.totalorder %s80, %s94
      %p96 = scmp.eq.s32.totalorder %s33, 0
      %p97 = por %p95, %p96
      %s99 = sadd.s32 %s98, 1
      %p102 = scmp.eq.s32.totalorder %s27, 1
      %p103 = scmp.ne.s32.totalorder %s98, %s100
      %p104 = scmp.eq.s32.totalorder %s27, 0
      %p105 = por %p103, %p104
      %p106 = scmp.ne.s32.totalorder %s98, %s100
      %p107 = scmp.eq.s32.totalorder %s32, 1
      %p108 = por %p106, %p107
      %p109 = scmp.ne.s32.totalorder %s100, %s101
      %p110 = scmp.eq.s32.totalorder %s32, 0
      %p111 = por %p109, %p110
      %p112 = scmp.ne.s32.totalorder %s100, %s101
      %p113 = scmp.eq.s32.totalorder %s33, 1
      %p114 = por %p112, %p113
      %p116 = scmp.ne.s32.totalorder %s101, %s115
      %p117 = scmp.eq.s32.totalorder %s33, 0
      %p118 = por %p116, %p117
      %s120 = sadd.s32 %s119, 1
      %p123 = scmp.eq.s32.totalorder %s27, 1
      %p124 = scmp.ne.s32.totalorder %s119, %s121
      %p125 = scmp.eq.s32.totalorder %s27, 0
      %p126 = por %p124, %p125
      %p127 = scmp.ne.s32.totalorder %s119, %s121
      %p128 = scmp.eq.s32.totalorder %s32, 1
      %p129 = por %p127, %p128
      %p130 = scmp.ne.s32.totalorder %s121, %s122
      %p131 = scmp.eq.s32.totalorder %s32, 0
      %p132 = por %p130, %p131
      %p133 = scmp.ne.s32.totalorder %s121, %s122
      %p134 = scmp.eq.s32.totalorder %s33, 1
      %p135 = por %p133, %p134
      %p137 = scmp.ne.s32.totalorder %s122, %s136
      %p138 = scmp.eq.s32.totalorder %s33, 0
      %p139 = por %p137, %p138
      %s141 = sadd.s32 %s140, 1
      %p144 = scmp.eq.s32.totalorder %s27, 1
      %p145 = scmp.ne.s32.totalorder %s140, %s142
      %p146 = scmp.eq.s32.totalorder %s27, 0
      %p147 = por %p145, %p146
      %p148 = scmp.ne.s32.totalorder %s140, %s142
      %p149 = scmp.eq.s32.totalorder %s32, 1
      %p150 = por %p148, %p149
      %p151 = scmp.ne.s32.totalorder %s142, %s143
      %p152 = scmp.eq.s32.totalorder %s32, 0
      %p153 = por %p151, %p152
      %p154 = scmp.ne.s32.totalorder %s142, %s143
      %p155 = scmp.eq.s32.totalorder %s33, 1
      %p156 = por %p154, %p155
      %p158 = scmp.ne.s32.totalorder %s143, %s157
      %p159 = scmp.eq.s32.totalorder %s33, 0
      %p160 = por %p158, %p159
      %s162 = sadd.s32 %s161, 1
      %p165 = scmp.eq.s32.totalorder %s27, 1
      %p166 = scmp.ne.s32.totalorder %s161, %s163
      %p167 = scmp.eq.s32.totalorder %s27, 0
      %p168 = por %p166, %p167
      %p169 = scmp.ne.s32.totalorder %s161, %s163
      %p170 = scmp.eq.s32.totalorder %s32, 1
      %p171 = por %p169, %p170
      %p172 = scmp.ne.s32.totalorder %s163, %s164
      %p173 = scmp.eq.s32.totalorder %s32, 0
      %p174 = por %p172, %p173
      %p175 = scmp.ne.s32.totalorder %s163, %s164
      %p176 = scmp.eq.s32.totalorder %s33, 1
      %p177 = por %p175, %p176
      %p179 = scmp.ne.s32.totalorder %s164, %s178
      %p180 = scmp.eq.s32.totalorder %s33, 0
      %p181 = por %p179, %p180
      %s183 = sadd.s32 %s182, 1
      %p186 = scmp.eq.s32.totalorder %s27, 1
      %p187 = scmp.ne.s32.totalorder %s182, %s184
      %p188 = scmp.eq.s32.totalorder %s27, 0
      %p189 = por %p187, %p188
      %p190 = scmp.ne.s32.totalorder %s182, %s184
      %p191 = scmp.eq.s32.totalorder %s32, 1
      %p192 = por %p190, %p191
      %p193 = scmp.ne.s32.totalorder %s184, %s185
      %p194 = scmp.eq.s32.totalorder %s32, 0
      %p195 = por %p193, %p194
      %p196 = scmp.ne.s32.totalorder %s184, %s185
      %p197 = scmp.eq.s32.totalorder %s33, 1
      %p198 = por %p196, %p197
      %p200 = scmp.ne.s32.totalorder %s185, %s199
      %p201 = scmp.eq.s32.totalorder %s33, 0
      %p202 = por %p200, %p201
      %s204 = sadd.s32 %s203, 1
      %p207 = scmp.eq.s32.totalorder %s27, 1
      %p208 = scmp.ne.s32.totalorder %s203, %s205
      %p209 = scmp.eq.s32.totalorder %s27, 0
      %p210 = por %p208, %p209
      %p211 = scmp.ne.s32.totalorder %s203, %s205
      %p212 = scmp.eq.s32.totalorder %s32, 1
      %p213 = por %p211, %p212
      %p214 = scmp.ne.s32.totalorder %s205, %s206
      %p215 = scmp.eq.s32.totalorder %s32, 0
      %p216 = por %p214, %p215
      %p217 = scmp.ne.s32.totalorder %s205, %s206
      %p218 = scmp.eq.s32.totalorder %s33, 1
      %p219 = por %p217, %p218
      %p221 = scmp.ne.s32.totalorder %s206, %s220
      %p222 = scmp.eq.s32.totalorder %s33, 0
      %p223 = por %p221, %p222
      %s225 = sadd.s32 %s224, 1
      %p228 = scmp.eq.s32.totalorder %s27, 1
      %p229 = scmp.ne.s32.totalorder %s224, %s226
      %p230 = scmp.eq.s32.totalorder %s27, 0
      %p231 = por %p229, %p230
      %p232 = scmp.ne.s32.totalorder %s224, %s226
      %p233 = scmp.eq.s32.totalorder %s32, 1
      %p234 = por %p232, %p233
      %p235 = scmp.ne.s32.totalorder %s226, %s227
      %p236 = scmp.eq.s32.totalorder %s32, 0
      %p237 = por %p235, %p236
      %p238 = scmp.ne.s32.totalorder %s226, %s227
      %p239 = scmp.eq.s32.totalorder %s33, 1
      %p240 = por %p238, %p239
      %p242 = scmp.ne.s32.totalorder %s227, %s241
      %p243 = scmp.eq.s32.totalorder %s33, 0
      %p244 = por %p242, %p243
      %s246 = sadd.s32 %s245, 1
      %p249 = scmp.eq.s32.totalorder %s27, 1
      %p250 = scmp.ne.s32.totalorder %s245, %s247
      %p251 = scmp.eq.s32.totalorder %s27, 0
      %p252 = por %p250, %p251
      %p253 = scmp.ne.s32.totalorder %s245, %s247
      %p254 = scmp.eq.s32.totalorder %s32, 1
      %p255 = por %p253, %p254
      %p256 = scmp.ne.s32.totalorder %s247, %s248
      %p257 = scmp.eq.s32.totalorder %s32, 0
      %p258 = por %p256, %p257
      %p259 = scmp.ne.s32.totalorder %s247, %s248
      %p260 = scmp.eq.s32.totalorder %s33, 1
      %p261 = por %p259, %p260
      %p263 = scmp.ne.s32.totalorder %s248, %s262
      %p264 = scmp.eq.s32.totalorder %s33, 0
      %p265 = por %p263, %p264
      %s267 = sadd.s32 %s266, 1
      %p270 = scmp.eq.s32.totalorder %s27, 1
      %p271 = scmp.ne.s32.totalorder %s266, %s268
      %p272 = scmp.eq.s32.totalorder %s27, 0
      %p273 = por %p271, %p272
      %p274 = scmp.ne.s32.totalorder %s266, %s268
      %p275 = scmp.eq.s32.totalorder %s32, 1
      %p276 = por %p274, %p275
      %p277 = scmp.ne.s32.totalorder %s268, %s269
      %p278 = scmp.eq.s32.totalorder %s32, 0
      %p279 = por %p277, %p278
      %p280 = scmp.ne.s32.totalorder %s268, %s269
      %p281 = scmp.eq.s32.totalorder %s33, 1
      %p282 = por %p280, %p281
      %p284 = scmp.ne.s32.totalorder %s269, %s283
      %p285 = scmp.eq.s32.totalorder %s33, 0
      %p286 = por %p284, %p285
      %s288 = sadd.s32 %s287, 1
      %p291 = scmp.eq.s32.totalorder %s27, 1
      %p292 = scmp.ne.s32.totalorder %s287, %s289
      %p293 = scmp.eq.s32.totalorder %s27, 0
      %p294 = por %p292, %p293
      %p295 = scmp.ne.s32.totalorder %s287, %s289
      %p296 = scmp.eq.s32.totalorder %s32, 1
      %p297 = por %p295, %p296
      %p298 = scmp.ne.s32.totalorder %s289, %s290
      %p299 = scmp.eq.s32.totalorder %s32, 0
      %p300 = por %p298, %p299
      %p301 = scmp.ne.s32.totalorder %s289, %s290
      %p302 = scmp.eq.s32.totalorder %s33, 1
      %p303 = por %p301, %p302
      %p305 = scmp.ne.s32.totalorder %s290, %s304
      %p306 = scmp.eq.s32.totalorder %s33, 0
      %p307 = por %p305, %p306
      %s309 = sadd.s32 %s308, 1
      %p312 = scmp.eq.s32.totalorder %s27, 1
      %p313 = scmp.ne.s32.totalorder %s308, %s310
      %p314 = scmp.eq.s32.totalorder %s27, 0
      %p315 = por %p313, %p314
      %p316 = scmp.ne.s32.totalorder %s308, %s310
      %p317 = scmp.eq.s32.totalorder %s32, 1
      %p318 = por %p316, %p317
      %p319 = scmp.ne.s32.totalorder %s310, %s311
      %p320 = scmp.eq.s32.totalorder %s32, 0
      %p321 = por %p319, %p320
      %p322 = scmp.ne.s32.totalorder %s310, %s311
      %p323 = scmp.eq.s32.totalorder %s33, 1
      %p324 = por %p322, %p323
      %p326 = scmp.ne.s32.totalorder %s311, %s325
      %p327 = scmp.eq.s32.totalorder %s33, 0
      %p328 = por %p326, %p327
      %p329 = scmp.le.s32.totalorder 1, %s27
      %p330 = scmp.lt.s32.totalorder %s27, 3
      %p331 = pnand %p329, %p330
      %p332 = pneg %p331
      // Predicated region
      $region9: #{tpu_custom_call.1} parent=5 // pred_check
        _
      $region10: #{tpu_custom_call.1} parent=5 // pred_check_branch
        %334 = sbr.rel (%p331) target = $region12
      $region11: #{tpu_custom_call.1} parent=5 // pred_region
        %s335 = ssub.s32 %s27, 1
        // Predicated region
        $region13: #{tpu_custom_call.1} parent=11 // pred_check
          %p336 = pneg %p48
        $region14: #{tpu_custom_call.1} parent=11 // pred_check_branch
          %338 = sbr.rel (%p336) target = $region16
        $region15: #{tpu_custom_call.1} parent=11 // pred_region
          %s340 = ssub.s32 256, 256
          %341 = vsyncadd [#allocation4], %s340
          %s342 = sshll.u32 [#allocation3], 4
          %s343 = int_to_ptr.vmem [resolvable:$true] %s342
          %348 = dma.hbm_to_vmem [thread:$0]  %s0, 256, %s343, [#allocation4], 128, 128, 8
        $region16: #{tpu_custom_call.1} parent=11 // pred_fallthru
          _
        // Predicated region
        $region17: #{tpu_custom_call.1} parent=11 // pred_check
          %p349 = pneg %p69
        $region18: #{tpu_custom_call.1} parent=11 // pred_check_branch
          %351 = sbr.rel (%p349) target = $region20
        $region19: #{tpu_custom_call.1} parent=11 // pred_region
          %s353 = ssub.s32 256, 256
          %354 = vsyncadd [#allocation7], %s353
          %s355 = sshll.u32 [#allocation6], 4
          %s356 = int_to_ptr.vmem [resolvable:$true] %s355
          %361 = dma.hbm_to_vmem [thread:$0]  %s1, 256, %s356, [#allocation7], 128, 128, 8
        $region20: #{tpu_custom_call.1} parent=11 // pred_fallthru
          _
        // Predicated region
        $region21: #{tpu_custom_call.1} parent=11 // pred_check
          %p362 = pneg %p90
        $region22: #{tpu_custom_call.1} parent=11 // pred_check_branch
          %364 = sbr.rel (%p362) target = $region24
        $region23: #{tpu_custom_call.1} parent=11 // pred_region
          _
        $region24: #{tpu_custom_call.1} parent=11 // pred_fallthru
          _
        // Predicated region
        $region25: #{tpu_custom_call.1} parent=11 // pred_check
          %p365 = pneg %p111
        $region26: #{tpu_custom_call.1} parent=11 // pred_check_branch
          %367 = sbr.rel (%p365) target = $region28
        $region27: #{tpu_custom_call.1} parent=11 // pred_region
          _
        $region28: #{tpu_custom_call.1} parent=11 // pred_fallthru
          _
        // Predicated region
        $region29: #{tpu_custom_call.1} parent=11 // pred_check
          %p368 = pneg %p132
        $region30: #{tpu_custom_call.1} parent=11 // pred_check_branch
          %370 = sbr.rel (%p368) target = $region32
        $region31: #{tpu_custom_call.1} parent=11 // pred_region
          _
        $region32: #{tpu_custom_call.1} parent=11 // pred_fallthru
          _
        // Predicated region
        $region33: #{tpu_custom_call.1} parent=11 // pred_check
          %p371 = pneg %p153
        $region34: #{tpu_custom_call.1} parent=11 // pred_check_branch
          %373 = sbr.rel (%p371) target = $region36
        $region35: #{tpu_custom_call.1} parent=11 // pred_region
          %s375 = ssub.s32 6144, 6144
          %376 = vsyncadd [#allocation7], %s375
          %s377 = sshll.u32 [#allocation8], 4
          %s378 = int_to_ptr.vmem [resolvable:$true] %s377
          %383 = dma.hbm_to_vmem [thread:$0]  %s5, 6144, %s378, [#allocation7], 192, 192, 12
        $region36: #{tpu_custom_call.1} parent=11 // pred_fallthru
          _
        // Predicated region
        $region37: #{tpu_custom_call.1} parent=11 // pred_check
          %p384 = pneg %p174
        $region38: #{tpu_custom_call.1} parent=11 // pred_check_branch
          %386 = sbr.rel (%p384) target = $region40
        $region39: #{tpu_custom_call.1} parent=11 // pred_region
          %s388 = ssub.s32 2048, 2048
          %389 = vsyncadd [#allocation10], %s388
          %s390 = sshll.u32 [#allocation9], 4
          %s391 = int_to_ptr.vmem [resolvable:$true] %s390
          %396 = dma.hbm_to_vmem [thread:$0]  %s6, 2048, %s391, [#allocation10], 64, 64, 4
        $region40: #{tpu_custom_call.1} parent=11 // pred_fallthru
          _
        // Predicated region
        $region41: #{tpu_custom_call.1} parent=11 // pred_check
          %p397 = pneg %p195
        $region42: #{tpu_custom_call.1} parent=11 // pred_check_branch
          %399 = sbr.rel (%p397) target = $region44
        $region43: #{tpu_custom_call.1} parent=11 // pred_region
          %s401 = ssub.s32 8192, 8192
          %402 = vsyncadd [#allocation10], %s401
          %s403 = sshll.u32 [#allocation11], 4
          %s404 = int_to_ptr.vmem [resolvable:$true] %s403
          %409 = dma.hbm_to_vmem [thread:$0]  %s7, 8192, %s404, [#allocation10], 256, 256, 16
        $region44: #{tpu_custom_call.1} parent=11 // pred_fallthru
          _
        // Predicated region
        $region45: #{tpu_custom_call.1} parent=11 // pred_check
          %p410 = pneg %p216
        $region46: #{tpu_custom_call.1} parent=11 // pred_check_branch
          %412 = sbr.rel (%p410) target = $region48
        $region47: #{tpu_custom_call.1} parent=11 // pred_region
          %s414 = ssub.s32 8192, 8192
          %415 = vsyncadd [#allocation13], %s414
          %s416 = sshll.u32 [#allocation12], 4
          %s417 = int_to_ptr.vmem [resolvable:$true] %s416
          %422 = dma.hbm_to_vmem [thread:$0]  %s8, 8192, %s417, [#allocation13], 64, 64, 4
        $region48: #{tpu_custom_call.1} parent=11 // pred_fallthru
          _
        // Predicated region
        $region49: #{tpu_custom_call.1} parent=11 // pred_check
          %p423 = pneg %p237
        $region50: #{tpu_custom_call.1} parent=11 // pred_check_branch
          %425 = sbr.rel (%p423) target = $region52
        $region51: #{tpu_custom_call.1} parent=11 // pred_region
          %s427 = ssub.s32 1024, 1024
          %428 = vsyncadd [#allocation13], %s427
          %s429 = sshll.u32 [#allocation14], 4
          %s430 = int_to_ptr.vmem [resolvable:$true] %s429
          %435 = dma.hbm_to_vmem [thread:$0]  %s9, 1024, %s430, [#allocation13], 512, 512, 32
        $region52: #{tpu_custom_call.1} parent=11 // pred_fallthru
          _
        // Predicated region
        $region53: #{tpu_custom_call.1} parent=11 // pred_check
          %p436 = pneg %p258
        $region54: #{tpu_custom_call.1} parent=11 // pred_check_branch
          %438 = sbr.rel (%p436) target = $region56
        $region55: #{tpu_custom_call.1} parent=11 // pred_region
          %s440 = ssub.s32 1024, 1024
          %441 = vsyncadd [#allocation16], %s440
          %s442 = sshll.u32 [#allocation15], 4
          %s443 = int_to_ptr.vmem [resolvable:$true] %s442
          %448 = dma.hbm_to_vmem [thread:$0]  %s10, 1024, %s443, [#allocation16], 64, 64, 4
        $region56: #{tpu_custom_call.1} parent=11 // pred_fallthru
          _
        // Predicated region
        $region57: #{tpu_custom_call.1} parent=11 // pred_check
          %p449 = pneg %p279
        $region58: #{tpu_custom_call.1} parent=11 // pred_check_branch
          %451 = sbr.rel (%p449) target = $region60
        $region59: #{tpu_custom_call.1} parent=11 // pred_region
          _
        $region60: #{tpu_custom_call.1} parent=11 // pred_fallthru
          _
      $region12: #{tpu_custom_call.1} parent=5 // pred_fallthru
        _
      %p452 = scmp.lt.s32.totalorder %s27, 2
      // Predicated region
      $region61: #{tpu_custom_call.1} parent=5 // pred_check
        %p453 = pneg %p452
      $region62: #{tpu_custom_call.1} parent=5 // pred_check_branch
        %455 = sbr.rel (%p453) target = $region64
      $region63: #{tpu_custom_call.1} parent=5 // pred_region
        _
      $region64: #{tpu_custom_call.1} parent=5 // pred_fallthru
        _
      %p456 = scmp.le.s32.totalorder 1, %s27
      %p457 = scmp.lt.s32.totalorder %s27, 3
      %p458 = pnand %p456, %p457
      %p459 = pneg %p458
      // Predicated region
      $region65: #{tpu_custom_call.1} parent=5 // pred_check
        _
      $region66: #{tpu_custom_call.1} parent=5 // pred_check_branch
        %461 = sbr.rel (%p458) target = $region68
      $region67: #{tpu_custom_call.1} parent=5 // pred_region
        %s462 = ssub.s32 %s27, 1
        // Predicated region
        $region69: #{tpu_custom_call.1} parent=67 // pred_check
          %p463 = pneg %p48
        $region70: #{tpu_custom_call.1} parent=67 // pred_check_branch
          %465 = sbr.rel (%p463) target = $region72
        $region71: #{tpu_custom_call.1} parent=67 // pred_region
          %466 = dma.done [#allocation4], 256
        $region72: #{tpu_custom_call.1} parent=67 // pred_fallthru
          _
        // Predicated region
        $region73: #{tpu_custom_call.1} parent=67 // pred_check
          %p467 = pneg %p69
        $region74: #{tpu_custom_call.1} parent=67 // pred_check_branch
          %469 = sbr.rel (%p467) target = $region76
        $region75: #{tpu_custom_call.1} parent=67 // pred_region
          %470 = dma.done [#allocation7], 256
        $region76: #{tpu_custom_call.1} parent=67 // pred_fallthru
          _
        // Predicated region
        $region77: #{tpu_custom_call.1} parent=67 // pred_check
          %p471 = pneg %p153
        $region78: #{tpu_custom_call.1} parent=67 // pred_check_branch
          %473 = sbr.rel (%p471) target = $region80
        $region79: #{tpu_custom_call.1} parent=67 // pred_region
          %474 = dma.done [#allocation7], 6144
        $region80: #{tpu_custom_call.1} parent=67 // pred_fallthru
          _
        // Predicated region
        $region81: #{tpu_custom_call.1} parent=67 // pred_check
          %p475 = pneg %p174
        $region82: #{tpu_custom_call.1} parent=67 // pred_check_branch
          %477 = sbr.rel (%p475) target = $region84
        $region83: #{tpu_custom_call.1} parent=67 // pred_region
          %478 = dma.done [#allocation10], 2048
        $region84: #{tpu_custom_call.1} parent=67 // pred_fallthru
          _
        // Predicated region
        $region85: #{tpu_custom_call.1} parent=67 // pred_check
          %p479 = pneg %p195
        $region86: #{tpu_custom_call.1} parent=67 // pred_check_branch
          %481 = sbr.rel (%p479) target = $region88
        $region87: #{tpu_custom_call.1} parent=67 // pred_region
          %482 = dma.done [#allocation10], 8192
        $region88: #{tpu_custom_call.1} parent=67 // pred_fallthru
          _
        // Predicated region
        $region89: #{tpu_custom_call.1} parent=67 // pred_check
          %p483 = pneg %p216
        $region90: #{tpu_custom_call.1} parent=67 // pred_check_branch
          %485 = sbr.rel (%p483) target = $region92
        $region91: #{tpu_custom_call.1} parent=67 // pred_region
          %486 = dma.done [#allocation13], 8192
        $region92: #{tpu_custom_call.1} parent=67 // pred_fallthru
          _
        // Predicated region
        $region93: #{tpu_custom_call.1} parent=67 // pred_check
          %p487 = pneg %p237
        $region94: #{tpu_custom_call.1} parent=67 // pred_check_branch
          %489 = sbr.rel (%p487) target = $region96
        $region95: #{tpu_custom_call.1} parent=67 // pred_region
          %490 = dma.done [#allocation13], 1024
        $region96: #{tpu_custom_call.1} parent=67 // pred_fallthru
          _
        // Predicated region
        $region97: #{tpu_custom_call.1} parent=67 // pred_check
          %p491 = pneg %p258
        $region98: #{tpu_custom_call.1} parent=67 // pred_check_branch
          %493 = sbr.rel (%p491) target = $region100
        $region99: #{tpu_custom_call.1} parent=67 // pred_region
          %494 = dma.done [#allocation16], 1024
        $region100: #{tpu_custom_call.1} parent=67 // pred_fallthru
          _
        %p495 = pneg %p48
        %p496 = pneg %p45
        %p497 = pneg %p69
        %p498 = pneg %p66
        %p499 = pneg %p90
        %p500 = pneg %p87
        %p501 = pneg %p111
        %p502 = pneg %p108
        %p503 = pneg %p132
        %p504 = pneg %p129
        %p505 = pneg %p153
        %p506 = pneg %p150
        %p507 = pneg %p174
        %p508 = pneg %p171
        %p509 = pneg %p195
        %p510 = pneg %p192
        %p511 = pneg %p216
        %p512 = pneg %p213
        %p513 = pneg %p237
        %p514 = pneg %p234
        %p515 = pneg %p258
        %p516 = pneg %p255
        %p517 = pneg %p279
        %p518 = pneg %p276
        %p519 = pneg %p300
        %p520 = pneg %p297
        %p521 = pneg %p321
        %p522 = pneg %p318
        %p524 = scmp.eq.s32.totalorder %s32, 0
        // Predicated region
        $region101: #{tpu_custom_call.1} parent=67 // pred_check
          %p525 = pneg %p524
        $region102: #{tpu_custom_call.1} parent=67 // pred_check_branch
          %527 = sbr.rel (%p525) target = $region104
        $region103: #{tpu_custom_call.1} parent=67 // pred_region
          %v528 = vld [vmem:[#allocation3] sm:$0xff]
          %v529 = vld [vmem:[#allocation3 + $0x8] sm:$0xff]
          %v530 = vld [vmem:[%s4] sm:$0x1]
          %v531 = vld [vmem:[%s4 + $0x1] sm:$0x1]
          %532 = vadd.xlane.f32.xlu0 %v528
          %v533 = vpop.xlane.xlu0 %532
          %534 = vadd.xlane.f32.xlu0 %v529
          %v535 = vpop.xlane.xlu0 %534
          %v536 = vrcp.pop 128.0
          %v537 = vmul.f32 %v533, %v536
          %v538 = vmul.f32 %v535, %v536
          %v539 = vsub.f32 %v528, %v537
          %v540 = vsub.f32 %v529, %v538
          %v541 = vmul.f32 %v539, %v539
          %v542 = vmul.f32 %v540, %v540
          %543 = vadd.xlane.f32.xlu0 %v541
          %v544 = vpop.xlane.xlu0 %543
          %545 = vadd.xlane.f32.xlu0 %v542
          %v546 = vpop.xlane.xlu0 %545
          %v547 = vmul.f32 %v544, %v536
          %v548 = vmul.f32 %v546, %v536
          %v549 = vadd.f32 %v547, 1e-12
          %v550 = vadd.f32 %v548, 1e-12
          %v551 = vrsqrt.pop %v549
          %v552 = vrsqrt.pop %v550
          %v553 = vmul.f32 %v539, %v551
          %v554 = vmul.f32 %v540, %v552
          %v555 = vlaneseq
          %v556 = vshrl.u32 %v555, 7
          %v557 = vsub.s32 0, %v556
          %v558 = vrot.slane %v530, %v557
          %v559 = vmul.f32 %v553, %v558
          %v560 = vmul.f32 %v554, %v558
          %v561 = vlaneseq
          %v562 = vshrl.u32 %v561, 7
          %v563 = vsub.s32 0, %v562
          %v564 = vrot.slane %v531, %v563
          %v565 = vadd.f32 %v559, %v564
          %v566 = vadd.f32 %v560, %v564
          %567 = vst [vmem:[#allocation2] sm:$0xff] %v565
          %568 = vst [vmem:[#allocation2 + $0x8] sm:$0xff] %v566
        $region104: #{tpu_custom_call.1} parent=67 // pred_fallthru
          _
        %v569 = vld [vmem:[#allocation2] sm:$0xff]
        %v570 = vld [vmem:[#allocation2 + $0x8] sm:$0xff]
        %v571 = vpack.c.bf16 %v570, %v569
        %s572 = smul.u32 %s32, 4
        %s573 = smul.addr %s572, 8
        %s574 = scalar_lea.vmem [#allocation14], %s573
        %v575 = vld [vmem:[%s574] sm:$0xff]
        %v576 = vld [vmem:[%s574 + $0x8] sm:$0xff]
        %v577 = vld [vmem:[%s574 + $0x10] sm:$0xff]
        %v578 = vld [vmem:[%s574 + $0x18] sm:$0xff]
        %s579 = smul.u32 %s32, 48
        %s580 = smul.addr %s579, 4
        %s581 = scalar_lea.vmem [#allocation8], %s580
        %v582 = vld [vmem:[%s581] sm:$0xff]
        %v583 = vld [vmem:[%s581 + $0x8] sm:$0xf]
        %v584 = vld [vmem:[%s581 + $0xc] sm:$0xff]
        %v585 = vld [vmem:[%s581 + $0x14] sm:$0xf]
        %v586 = vld [vmem:[%s581 + $0x18] sm:$0xff]
        %v587 = vld [vmem:[%s581 + $0x20] sm:$0xf]
        %v588 = vld [vmem:[%s581 + $0x24] sm:$0xff]
        %v589 = vld [vmem:[%s581 + $0x2c] sm:$0xf]
        %v590 = vld [vmem:[%s581 + $0x30] sm:$0xff]
        %v591 = vld [vmem:[%s581 + $0x38] sm:$0xf]
        %v592 = vld [vmem:[%s581 + $0x3c] sm:$0xff]
        %v593 = vld [vmem:[%s581 + $0x44] sm:$0xf]
        %v594 = vld [vmem:[%s581 + $0x48] sm:$0xff]
        %v595 = vld [vmem:[%s581 + $0x50] sm:$0xf]
        %v596 = vld [vmem:[%s581 + $0x54] sm:$0xff]
        %v597 = vld [vmem:[%s581 + $0x5c] sm:$0xf]
        %v598 = vld [vmem:[%s581 + $0x60] sm:$0xff]
        %v599 = vld [vmem:[%s581 + $0x68] sm:$0xf]
        %v600 = vld [vmem:[%s581 + $0x6c] sm:$0xff]
        %v601 = vld [vmem:[%s581 + $0x74] sm:$0xf]
        %v602 = vld [vmem:[%s581 + $0x78] sm:$0xff]
        %v603 = vld [vmem:[%s581 + $0x80] sm:$0xf]
        %v604 = vld [vmem:[%s581 + $0x84] sm:$0xff]
        %v605 = vld [vmem:[%s581 + $0x8c] sm:$0xf]
        %v606 = vld [vmem:[%s581 + $0x90] sm:$0xff]
        %v607 = vld [vmem:[%s581 + $0x98] sm:$0xf]
        %v608 = vld [vmem:[%s581 + $0x9c] sm:$0xff]
        %v609 = vld [vmem:[%s581 + $0xa4] sm:$0xf]
        %v610 = vld [vmem:[%s581 + $0xa8] sm:$0xff]
        %v611 = vld [vmem:[%s581 + $0xb0] sm:$0xf]
        %v612 = vld [vmem:[%s581 + $0xb4] sm:$0xff]
        %v613 = vld [vmem:[%s581 + $0xbc] sm:$0xf]
        %v614 = vlaneseq
        %v615 = vshrl.u32 %v614, 7
        %v616 = vsub.s32 0, %v615
        %v617 = vrot.slane %v575, %v616
        %v618 = vlaneseq
        %v619 = vshrl.u32 %v618, 7
        %v620 = vsub.s32 0, %v619
        %v621 = vrot.slane %v576, %v620
        %v622 = vlaneseq
        %v623 = vshrl.u32 %v622, 7
        %v624 = vsub.s32 0, %v623
        %v625 = vrot.slane %v577, %v624
        %v658 = vunpack.c.l.b16 %v582
        %v659 = vunpack.c.h.b16 %v582
        %v660 = vunpack.c.l.b16 %v583
        %v661 = vunpack.c.l.b16 %v584
        %v662 = vunpack.c.h.b16 %v584
        %v663 = vunpack.c.l.b16 %v585
        %v664 = vunpack.c.l.b16 %v586
        %v665 = vunpack.c.h.b16 %v586
        %v666 = vunpack.c.l.b16 %v587
        %v667 = vunpack.c.l.b16 %v588
        %v668 = vunpack.c.h.b16 %v588
        %v669 = vunpack.c.l.b16 %v589
        %v670 = vunpack.c.l.b16 %v590
        %v671 = vunpack.c.h.b16 %v590
        %v672 = vunpack.c.l.b16 %v591
        %v673 = vunpack.c.l.b16 %v592
        %v674 = vunpack.c.h.b16 %v592
        %v675 = vunpack.c.l.b16 %v593
        %v676 = vunpack.c.l.b16 %v594
        %v677 = vunpack.c.h.b16 %v594
        %v678 = vunpack.c.l.b16 %v595
        %v679 = vunpack.c.l.b16 %v596
        %v680 = vunpack.c.h.b16 %v596
        %v681 = vunpack.c.l.b16 %v597
        %v682 = vunpack.c.l.b16 %v598
        %v683 = vunpack.c.h.b16 %v598
        %v684 = vunpack.c.l.b16 %v599
        %v685 = vunpack.c.l.b16 %v600
        %v686 = vunpack.c.h.b16 %v600
        %v687 = vunpack.c.l.b16 %v601
        %v688 = vunpack.c.l.b16 %v602
        %v689 = vunpack.c.h.b16 %v602
        %v690 = vunpack.c.l.b16 %v603
        %v691 = vunpack.c.l.b16 %v604
        %v692 = vunpack.c.h.b16 %v604
        %v693 = vunpack.c.l.b16 %v605
        %v694 = vunpack.c.l.b16 %v606
        %v695 = vunpack.c.h.b16 %v606
        %v696 = vunpack.c.l.b16 %v607
        %v697 = vunpack.c.l.b16 %v608
        %v698 = vunpack.c.h.b16 %v608
        %v699 = vunpack.c.l.b16 %v609
        %v700 = vunpack.c.l.b16 %v610
        %v701 = vunpack.c.h.b16 %v610
        %v702 = vunpack.c.l.b16 %v611
        %v703 = vunpack.c.l.b16 %v612
        %v704 = vunpack.c.h.b16 %v612
        %v705 = vunpack.c.l.b16 %v613
        %v706 = vpack.c.b16 %v661, %v658
        %v707 = vpack.c.b16 %v662, %v659
        %v708 = vpack.c.b16 %v663, %v660
        %v709 = vpack.c.b16 %v667, %v664
        %v710 = vpack.c.b16 %v668, %v665
        %v711 = vpack.c.b16 %v669, %v666
        %v712 = vpack.c.b16 %v673, %v670
        %v713 = vpack.c.b16 %v674, %v671
        %v714 = vpack.c.b16 %v675, %v672
        %v715 = vpack.c.b16 %v679, %v676
        %v716 = vpack.c.b16 %v680, %v677
        %v717 = vpack.c.b16 %v681, %v678
        %v718 = vpack.c.b16 %v685, %v682
        %v719 = vpack.c.b16 %v686, %v683
        %v720 = vpack.c.b16 %v687, %v684
        %v721 = vpack.c.b16 %v691, %v688
        %v722 = vpack.c.b16 %v692, %v689
        %v723 = vpack.c.b16 %v693, %v690
        %v724 = vpack.c.b16 %v697, %v694
        %v725 = vpack.c.b16 %v698, %v695
        %v726 = vpack.c.b16 %v699, %v696
        %v727 = vpack.c.b16 %v703, %v700
        %v728 = vpack.c.b16 %v704, %v701
        %v729 = vpack.c.b16 %v705, %v702
        %754 = vmatprep.subr.bf16.mxu0 %v707
        %755 = vmatpush1.bf16.msra.mxu0 %v706
        %756 = vmatprep.subr.bf16.mxu0 %v710
        %757 = vmatpush1.bf16.msra.mxu0 %v709
        %758 = vmatprep.subr.bf16.mxu0 %v713
        %759 = vmatpush1.bf16.msra.mxu0 %v712
        %760 = vmatprep.subr.bf16.mxu0 %v716
        %761 = vmatpush1.bf16.msra.mxu0 %v715
        %762 = vmatprep.subr.bf16.mxu0 %v719
        %763 = vmatpush1.bf16.msra.mxu0 %v718
        %764 = vmatprep.subr.bf16.mxu0 %v722
        %765 = vmatpush1.bf16.msra.mxu0 %v721
        %766 = vmatprep.subr.bf16.mxu0 %v725
        %767 = vmatpush1.bf16.msra.mxu0 %v724
        %768 = vmatprep.subr.bf16.mxu0 %v728
        %769 = vmatpush1.bf16.msra.mxu0 %v727
        %770 = vmatprep.subr.bf16.mxu0 0
        %771 = vmatpush1.bf16.msra.mxu0 0
        %772 = vmatprep.subr.bf16.mxu0 0
        %773 = vmatpush1.bf16.msra.mxu0 0
        %774 = vmatprep.subr.bf16.mxu0 0
        %775 = vmatpush1.bf16.msra.mxu0 0
        %776 = vmatprep.subr.bf16.mxu0 0
        %777 = vmatpush1.bf16.msra.mxu0 0
        %778 = vmatprep.subr.bf16.mxu0 0
        %779 = vmatpush1.bf16.msra.mxu0 0
        %780 = vmatprep.subr.bf16.mxu0 0
        %781 = vmatpush1.bf16.msra.mxu0 0
        %782 = vmatprep.subr.bf16.mxu0 0
        %783 = vmatpush1.bf16.msra.mxu0 0
        %784 = vmatprep.subr.bf16.mxu0 0
        %785 = vmatpush1.bf16.msra.mxu0 0
        %786 = vmatprep.mubr.bf16.mxu0 0
        %787 = vmatmul.mubr.bf16.gmra.mrb[0].mxu0 %v571
        %v788 = vpop.f32.mrb[0].mxu0
        %v789 = vadd.f32 %v617, %v788
        %v790 = vpop.f32.mrb[0].mxu0
        %v791 = vadd.f32 %v621, %v790
        %v792 = vpop.f32.mrb[0].mxu0
        %v793 = vadd.f32 %v617, %v792
        %v794 = vpop.f32.mrb[0].mxu0
        %v795 = vadd.f32 %v621, %v794
        %796 = vdwg.mxu0
        %797 = vmatprep.subr.bf16.mxu0 0
        %798 = vmatpush1.bf16.msra.mxu0 %v708
        %799 = vmatprep.subr.bf16.mxu0 0
        %800 = vmatpush1.bf16.msra.mxu0 %v711
        %801 = vmatprep.subr.bf16.mxu0 0
        %802 = vmatpush1.bf16.msra.mxu0 %v714
        %803 = vmatprep.subr.bf16.mxu0 0
        %804 = vmatpush1.bf16.msra.mxu0 %v717
        %805 = vmatprep.subr.bf16.mxu0 0
        %806 = vmatpush1.bf16.msra.mxu0 %v720
        %807 = vmatprep.subr.bf16.mxu0 0
        %808 = vmatpush1.bf16.msra.mxu0 %v723
        %809 = vmatprep.subr.bf16.mxu0 0
        %810 = vmatpush1.bf16.msra.mxu0 %v726
        %811 = vmatprep.subr.bf16.mxu0 0
        %812 = vmatpush1.bf16.msra.mxu0 %v729
        %813 = vmatprep.subr.bf16.mxu0 0
        %814 = vmatpush1.bf16.msra.mxu0 0
        %815 = vmatprep.subr.bf16.mxu0 0
        %816 = vmatpush1.bf16.msra.mxu0 0
        %817 = vmatprep.subr.bf16.mxu0 0
        %818 = vmatpush1.bf16.msra.mxu0 0
        %819 = vmatprep.subr.bf16.mxu0 0
        %820 = vmatpush1.bf16.msra.mxu0 0
        %821 = vmatprep.subr.bf16.mxu0 0
        %822 = vmatpush1.bf16.msra.mxu0 0
        %823 = vmatprep.subr.bf16.mxu0 0
        %824 = vmatpush1.bf16.msra.mxu0 0
        %825 = vmatprep.subr.bf16.mxu0 0
        %826 = vmatpush1.bf16.msra.mxu0 0
        %827 = vmatprep.subr.bf16.mxu0 0
        %828 = vmatpush1.bf16.msra.mxu0 0
        %829 = vmatprep.mubr.bf16.mxu0 0
        %830 = vmatmul.mubr.bf16.gmra.mrb[0].mxu0 %v571
        %v831 = vpop.f32.mrb[0].mxu0
        %v832 = vadd.f32 %v625, %v831
        %v833 = vpop.f32.mrb[0].mxu0
        %v834 = vpop.f32.mrb[0].mxu0
        %v835 = vadd.f32 %v625, %v834
        %v836 = vpop.f32.mrb[0].mxu0
        %837 = vdwg.mxu0
        %v838 = vld [vmem:[#allocation6] sm:$0xff]
        %v839 = vld [vmem:[#allocation6 + $0x8] sm:$0xff]
        %s840 = smul.u32 %s32, 16
        %s841 = smul.addr %s840, 4
        %s842 = scalar_lea.vmem [#allocation9], %s841
        %v843 = vld [vmem:[%s842] sm:$0xf]
        %v844 = vld [vmem:[%s842 + $0x4] sm:$0xf]
        %v845 = vld [vmem:[%s842 + $0x8] sm:$0xf]
        %v846 = vld [vmem:[%s842 + $0xc] sm:$0xf]
        %v847 = vld [vmem:[%s842 + $0x10] sm:$0xf]
        %v848 = vld [vmem:[%s842 + $0x14] sm:$0xf]
        %v849 = vld [vmem:[%s842 + $0x18] sm:$0xf]
        %v850 = vld [vmem:[%s842 + $0x1c] sm:$0xf]
        %v851 = vld [vmem:[%s842 + $0x20] sm:$0xf]
        %v852 = vld [vmem:[%s842 + $0x24] sm:$0xf]
        %v853 = vld [vmem:[%s842 + $0x28] sm:$0xf]
        %v854 = vld [vmem:[%s842 + $0x2c] sm:$0xf]
        %v855 = vld [vmem:[%s842 + $0x30] sm:$0xf]
        %v856 = vld [vmem:[%s842 + $0x34] sm:$0xf]
        %v857 = vld [vmem:[%s842 + $0x38] sm:$0xf]
        %v858 = vld [vmem:[%s842 + $0x3c] sm:$0xf]
        %v859 = vpack.c.bf16 %v793, %v789
        %v860 = vpack.c.bf16 %v795, %v791
        %v861 = vpack.c.bf16 %v835, %v832
        %vm862 = vcmask 523264
        %v864 = vsel %vm862, %v859, 0
        %v867 = vsel %vm862, %v860, 0
        %869 = vmatprep.subr.bf16.mxu0 0
        %870 = vmatpush1.bf16.xpose.msra.mxu0 %v867
        %871 = vmatprep.subr.bf16.mxu0 0
        %872 = vmatpush1.bf16.xpose.msra.mxu0 0
        %873 = vmatprep.subr.bf16.mxu0 0
        %874 = vmatpush1.bf16.xpose.msra.mxu0 0
        %875 = vmatprep.subr.bf16.mxu0 0
        %876 = vmatpush1.bf16.xpose.msra.mxu0 0
        %877 = vmatprep.subr.bf16.mxu0 0
        %878 = vmatpush1.bf16.xpose.msra.mxu0 0
        %879 = vmatprep.subr.bf16.mxu0 0
        %880 = vmatpush1.bf16.xpose.msra.mxu0 0
        %881 = vmatprep.subr.bf16.mxu0 0
        %882 = vmatpush1.bf16.xpose.msra.mxu0 0
        %883 = vmatprep.subr.bf16.mxu0 0
        %884 = vmatpush1.bf16.xpose.msra.mxu0 0
        %885 = vmatprep.subr.bf16.mxu0 0
        %886 = vmatpush1.bf16.xpose.msra.mxu0 0
        %887 = vmatprep.subr.bf16.mxu0 0
        %888 = vmatpush1.bf16.xpose.msra.mxu0 0
        %889 = vmatprep.subr.bf16.mxu0 0
        %890 = vmatpush1.bf16.xpose.msra.mxu0 0
        %891 = vmatprep.subr.bf16.mxu0 0
        %892 = vmatpush1.bf16.xpose.msra.mxu0 0
        %893 = vmatprep.subr.bf16.mxu0 0
        %894 = vmatpush1.bf16.xpose.msra.mxu0 0
        %895 = vmatprep.subr.bf16.mxu0 0
        %896 = vmatpush1.bf16.xpose.msra.mxu0 0
        %897 = vmatprep.subr.bf16.mxu0 0
        %898 = vmatpush1.bf16.xpose.msra.mxu0 0
        %899 = vmatprep.subr.bf16.mxu0 0
        %900 = vmatpush1.bf16.xpose.msra.mxu0 0
        %901 = vmatprep.mubr.bf16.mxu0 0
        %902 = vmatmul.mubr.bf16.gmra.mrb[0].mxu0 %v864
        %v903 = vpop.f32.mrb[0].mxu0
        %v904 = vadd.f32 %v838, %v903
        %v905 = vpop.f32.mrb[0].mxu0
        %v906 = vpop.f32.mrb[0].mxu0
        %v907 = vadd.f32 %v839, %v906
        %v908 = vpop.f32.mrb[0].mxu0
        %909 = vdwg.mxu0
        %vm910 = vcmask 130048
        %v911 = vsel %vm910, %v904, -inf
        %912 = vmax.xlane.f32.xlu0 %v911
        %v913 = vpop.xlane.xlu0 %912
        %v914 = vsel %vm910, %v907, -inf
        %915 = vmax.xlane.f32.xlu0 %v914
        %v916 = vpop.xlane.xlu0 %915
        %v917 = vsub.f32 %v904, %v913
        %v918 = vsub.f32 %v907, %v916
        %v919 = vmul.f32 %v917, 1.442695
        %v920 = vpow.pop %v919
        %v921 = vmul.f32 %v918, 1.442695
        %v922 = vpow.pop %v921
        %v923 = vsel %vm910, %v920, 0.0
        %924 = vadd.xlane.f32.xlu0 %v923
        %v925 = vpop.xlane.xlu0 %924
        %v926 = vsel %vm910, %v922, 0.0
        %927 = vadd.xlane.f32.xlu0 %v926
        %v928 = vpop.xlane.xlu0 %927
        %v929 = vrcp.pop %v925
        %v930 = vrcp.pop %v928
        %v931 = vmul.f32 %v920, %v929
        %v932 = vmul.f32 %v922, %v930
        %v933 = vpack.c.bf16 %v932, %v931
        %v935 = vsel %vm910, %v933, 0
        %937 = vmatprep.subr.bf16.mxu0 0
        %938 = vmatpush1.bf16.msra.mxu0 %v861
        %939 = vmatprep.subr.bf16.mxu0 0
        %940 = vmatpush1.bf16.msra.mxu0 0
        %941 = vmatprep.subr.bf16.mxu0 0
        %942 = vmatpush1.bf16.msra.mxu0 0
        %943 = vmatprep.subr.bf16.mxu0 0
        %944 = vmatpush1.bf16.msra.mxu0 0
        %945 = vmatprep.subr.bf16.mxu0 0
        %946 = vmatpush1.bf16.msra.mxu0 0
        %947 = vmatprep.subr.bf16.mxu0 0
        %948 = vmatpush1.bf16.msra.mxu0 0
        %949 = vmatprep.subr.bf16.mxu0 0
        %950 = vmatpush1.bf16.msra.mxu0 0
        %951 = vmatprep.subr.bf16.mxu0 0
        %952 = vmatpush1.bf16.msra.mxu0 0
        %953 = vmatprep.subr.bf16.mxu0 0
        %954 = vmatpush1.bf16.msra.mxu0 0
        %955 = vmatprep.subr.bf16.mxu0 0
        %956 = vmatpush1.bf16.msra.mxu0 0
        %957 = vmatprep.subr.bf16.mxu0 0
        %958 = vmatpush1.bf16.msra.mxu0 0
        %959 = vmatprep.subr.bf16.mxu0 0
        %960 = vmatpush1.bf16.msra.mxu0 0
        %961 = vmatprep.subr.bf16.mxu0 0
        %962 = vmatpush1.bf16.msra.mxu0 0
        %963 = vmatprep.subr.bf16.mxu0 0
        %964 = vmatpush1.bf16.msra.mxu0 0
        %965 = vmatprep.subr.bf16.mxu0 0
        %966 = vmatpush1.bf16.msra.mxu0 0
        %967 = vmatprep.subr.bf16.mxu0 0
        %968 = vmatpush1.bf16.msra.mxu0 0
        %969 = vmatprep.mubr.bf16.mxu0 0
        %970 = vmatmul.mubr.bf16.gmra.mrb[0].mxu0 %v935
        %v971 = vpop.f32.mrb[0].mxu0
        %v972 = vadd.f32 0.0, %v971
        %v973 = vpop.f32.mrb[0].mxu0
        %v974 = vpop.f32.mrb[0].mxu0
        %v975 = vadd.f32 0.0, %v974
        %v976 = vpop.f32.mrb[0].mxu0
        %977 = vdwg.mxu0
        %v978 = vpack.c.bf16 %v975, %v972
        %v987 = vunpack.c.l.b16 %v843
        %v988 = vunpack.c.l.b16 %v844
        %v989 = vunpack.c.l.b16 %v845
        %v990 = vunpack.c.l.b16 %v846
        %v991 = vunpack.c.l.b16 %v847
        %v992 = vunpack.c.l.b16 %v848
        %v993 = vunpack.c.l.b16 %v849
        %v994 = vunpack.c.l.b16 %v850
        %v995 = vpack.c.b16 %v988, %v987
        %v996 = vpack.c.b16 %v990, %v989
        %v997 = vpack.c.b16 %v992, %v991
        %v998 = vpack.c.b16 %v994, %v993
        %v1004 = vsel %vm862, %v978, 0
        %1006 = vmatprep.subr.bf16.mxu0 0
        %1007 = vmatpush1.bf16.msra.mxu0 %v995
        %1008 = vmatprep.subr.bf16.mxu0 0
        %1009 = vmatpush1.bf16.msra.mxu0 %v996
        %1010 = vmatprep.subr.bf16.mxu0 0
        %1011 = vmatpush1.bf16.msra.mxu0 %v997
        %1012 = vmatprep.subr.bf16.mxu0 0
        %1013 = vmatpush1.bf16.msra.mxu0 %v998
        %1014 = vmatprep.subr.bf16.mxu0 0
        %1015 = vmatpush1.bf16.msra.mxu0 0
        %1016 = vmatprep.subr.bf16.mxu0 0
        %1017 = vmatpush1.bf16.msra.mxu0 0
        %1018 = vmatprep.subr.bf16.mxu0 0
        %1019 = vmatpush1.bf16.msra.mxu0 0
        %1020 = vmatprep.subr.bf16.mxu0 0
        %1021 = vmatpush1.bf16.msra.mxu0 0
        %1022 = vmatprep.subr.bf16.mxu0 0
        %1023 = vmatpush1.bf16.msra.mxu0 0
        %1024 = vmatprep.subr.bf16.mxu0 0
        %1025 = vmatpush1.bf16.msra.mxu0 0
        %1026 = vmatprep.subr.bf16.mxu0 0
        %1027 = vmatpush1.bf16.msra.mxu0 0
        %1028 = vmatprep.subr.bf16.mxu0 0
        %1029 = vmatpush1.bf16.msra.mxu0 0
        %1030 = vmatprep.subr.bf16.mxu0 0
        %1031 = vmatpush1.bf16.msra.mxu0 0
        %1032 = vmatprep.subr.bf16.mxu0 0
        %1033 = vmatpush1.bf16.msra.mxu0 0
        %1034 = vmatprep.subr.bf16.mxu0 0
        %1035 = vmatpush1.bf16.msra.mxu0 0
        %1036 = vmatprep.subr.bf16.mxu0 0
        %1037 = vmatpush1.bf16.msra.mxu0 0
        %1038 = vmatprep.mubr.bf16.mxu0 0
        %1039 = vmatmul.mubr.bf16.gmra.mrb[0].mxu0 %v1004
        %v1040 = vpop.f32.mrb[0].mxu0
        %v1041 = vadd.f32 0.0, %v1040
        %v1042 = vpop.f32.mrb[0].mxu0
        %v1043 = vpop.f32.mrb[0].mxu0
        %v1044 = vadd.f32 0.0, %v1043
        %v1045 = vpop.f32.mrb[0].mxu0
        %1046 = vdwg.mxu0
        %v1047 = vlaneseq
        %v1048 = vshrl.u32 %v1047, 7
        %v1049 = vsub.s32 2, %v1048
        %v1050 = vrot.slane %v575, %v1049
        %v1051 = vadd.f32 %v1050, %v1041
        %v1052 = vadd.f32 %v1050, %v1044
        %1054 = vrot.lane.b32.xlu0 %v859, 64
        %v1055 = vpop.permute.xlu0 %1054
        %1057 = vrot.lane.b32.xlu0 %v860, 64
        %v1058 = vpop.permute.xlu0 %1057
        %v1060 = vsel %vm862, %v1055, 0
        %v1063 = vsel %vm862, %v1058, 0
        %1065 = vmatprep.subr.bf16.mxu0 0
        %1066 = vmatpush1.bf16.xpose.msra.mxu0 %v1063
        %1067 = vmatprep.subr.bf16.mxu0 0
        %1068 = vmatpush1.bf16.xpose.msra.mxu0 0
        %1069 = vmatprep.subr.bf16.mxu0 0
        %1070 = vmatpush1.bf16.xpose.msra.mxu0 0
        %1071 = vmatprep.subr.bf16.mxu0 0
        %1072 = vmatpush1.bf16.xpose.msra.mxu0 0
        %1073 = vmatprep.subr.bf16.mxu0 0
        %1074 = vmatpush1.bf16.xpose.msra.mxu0 0
        %1075 = vmatprep.subr.bf16.mxu0 0
        %1076 = vmatpush1.bf16.xpose.msra.mxu0 0
        %1077 = vmatprep.subr.bf16.mxu0 0
        %1078 = vmatpush1.bf16.xpose.msra.mxu0 0
        %1079 = vmatprep.subr.bf16.mxu0 0
        %1080 = vmatpush1.bf16.xpose.msra.mxu0 0
        %1081 = vmatprep.subr.bf16.mxu0 0
        %1082 = vmatpush1.bf16.xpose.msra.mxu0 0
        %1083 = vmatprep.subr.bf16.mxu0 0
        %1084 = vmatpush1.bf16.xpose.msra.mxu0 0
        %1085 = vmatprep.subr.bf16.mxu0 0
        %1086 = vmatpush1.bf16.xpose.msra.mxu0 0
        %1087 = vmatprep.subr.bf16.mxu0 0
        %1088 = vmatpush1.bf16.xpose.msra.mxu0 0
        %1089 = vmatprep.subr.bf16.mxu0 0
        %1090 = vmatpush1.bf16.xpose.msra.mxu0 0
        %1091 = vmatprep.subr.bf16.mxu0 0
        %1092 = vmatpush1.bf16.xpose.msra.mxu0 0
        %1093 = vmatprep.subr.bf16.mxu0 0
        %1094 = vmatpush1.bf16.xpose.msra.mxu0 0
        %1095 = vmatprep.subr.bf16.mxu0 0
        %1096 = vmatpush1.bf16.xpose.msra.mxu0 0
        %1097 = vmatprep.mubr.bf16.mxu0 0
        %1098 = vmatmul.mubr.bf16.gmra.mrb[0].mxu0 %v1060
        %v1099 = vpop.f32.mrb[0].mxu0
        %v1100 = vadd.f32 %v838, %v1099
        %v1101 = vpop.f32.mrb[0].mxu0
        %v1102 = vpop.f32.mrb[0].mxu0
        %v1103 = vadd.f32 %v839, %v1102
        %v1104 = vpop.f32.mrb[0].mxu0
        %1105 = vdwg.mxu0
        %v1106 = vsel %vm910, %v1100, -inf
        %1107 = vmax.xlane.f32.xlu0 %v1106
        %v1108 = vpop.xlane.xlu0 %1107
        %v1109 = vsel %vm910, %v1103, -inf
        %1110 = vmax.xlane.f32.xlu0 %v1109
        %v1111 = vpop.xlane.xlu0 %1110
        %v1112 = vsub.f32 %v1100, %v1108
        %v1113 = vsub.f32 %v1103, %v1111
        %v1114 = vmul.f32 %v1112, 1.442695
        %v1115 = vpow.pop %v1114
        %v1116 = vmul.f32 %v1113, 1.442695
        %v1117 = vpow.pop %v1116
        %v1118 = vsel %vm910, %v1115, 0.0
        %1119 = vadd.xlane.f32.xlu0 %v1118
        %v1120 = vpop.xlane.xlu0 %1119
        %v1121 = vsel %vm910, %v1117, 0.0
        %1122 = vadd.xlane.f32.xlu0 %v1121
        %v1123 = vpop.xlane.xlu0 %1122
        %v1124 = vrcp.pop %v1120
        %v1125 = vrcp.pop %v1123
        %v1126 = vmul.f32 %v1115, %v1124
        %v1127 = vmul.f32 %v1117, %v1125
        %v1128 = vpack.c.bf16 %v1127, %v1126
        %1130 = vrot.lane.b32.xlu0 %v861, 64
        %v1131 = vpop.permute.xlu0 %1130
        %v1134 = vsel %vm910, %v1128, 0
        %1136 = vmatprep.subr.bf16.mxu0 0
        %1137 = vmatpush1.bf16.msra.mxu0 %v1131
        %1138 = vmatprep.subr.bf16.mxu0 0
        %1139 = vmatpush1.bf16.msra.mxu0 0
        %1140 = vmatprep.subr.bf16.mxu0 0
        %1141 = vmatpush1.bf16.msra.mxu0 0
        %1142 = vmatprep.subr.bf16.mxu0 0
        %1143 = vmatpush1.bf16.msra.mxu0 0
        %1144 = vmatprep.subr.bf16.mxu0 0
        %1145 = vmatpush1.bf16.msra.mxu0 0
        %1146 = vmatprep.subr.bf16.mxu0 0
        %1147 = vmatpush1.bf16.msra.mxu0 0
        %1148 = vmatprep.subr.bf16.mxu0 0
        %1149 = vmatpush1.bf16.msra.mxu0 0
        %1150 = vmatprep.subr.bf16.mxu0 0
        %1151 = vmatpush1.bf16.msra.mxu0 0
        %1152 = vmatprep.subr.bf16.mxu0 0
        %1153 = vmatpush1.bf16.msra.mxu0 0
        %1154 = vmatprep.subr.bf16.mxu0 0
        %1155 = vmatpush1.bf16.msra.mxu0 0
        %1156 = vmatprep.subr.bf16.mxu0 0
        %1157 = vmatpush1.bf16.msra.mxu0 0
        %1158 = vmatprep.subr.bf16.mxu0 0
        %1159 = vmatpush1.bf16.msra.mxu0 0
        %1160 = vmatprep.subr.bf16.mxu0 0
        %1161 = vmatpush1.bf16.msra.mxu0 0
        %1162 = vmatprep.subr.bf16.mxu0 0
        %1163 = vmatpush1.bf16.msra.mxu0 0
        %1164 = vmatprep.subr.bf16.mxu0 0
        %1165 = vmatpush1.bf16.msra.mxu0 0
        %1166 = vmatprep.subr.bf16.mxu0 0
        %1167 = vmatpush1.bf16.msra.mxu0 0
        %1168 = vmatprep.mubr.bf16.mxu0 0
        %1169 = vmatmul.mubr.bf16.gmra.mrb[0].mxu0 %v1134
        %v1170 = vpop.f32.mrb[0].mxu0
        %v1171 = vadd.f32 0.0, %v1170
        %v1172 = vpop.f32.mrb[0].mxu0
        %v1173 = vpop.f32.mrb[0].mxu0
        %v1174 = vadd.f32 0.0, %v1173
        %v1175 = vpop.f32.mrb[0].mxu0
        %1176 = vdwg.mxu0
        %v1177 = vpack.c.bf16 %v1174, %v1171
        %v1186 = vunpack.c.l.b16 %v851
        %v1187 = vunpack.c.l.b16 %v852
        %v1188 = vunpack.c.l.b16 %v853
        %v1189 = vunpack.c.l.b16 %v854
        %v1190 = vunpack.c.l.b16 %v855
        %v1191 = vunpack.c.l.b16 %v856
        %v1192 = vunpack.c.l.b16 %v857
        %v1193 = vunpack.c.l.b16 %v858
        %v1194 = vpack.c.b16 %v1187, %v1186
        %v1195 = vpack.c.b16 %v1189, %v1188
        %v1196 = vpack.c.b16 %v1191, %v1190
        %v1197 = vpack.c.b16 %v1193, %v1192
        %v1203 = vsel %vm862, %v1177, 0
        %1205 = vmatprep.subr.bf16.mxu0 0
        %1206 = vmatpush1.bf16.msra.mxu0 %v1194
        %1207 = vmatprep.subr.bf16.mxu0 0
        %1208 = vmatpush1.bf16.msra.mxu0 %v1195
        %1209 = vmatprep.subr.bf16.mxu0 0
        %1210 = vmatpush1.bf16.msra.mxu0 %v1196
        %1211 = vmatprep.subr.bf16.mxu0 0
        %1212 = vmatpush1.bf16.msra.mxu0 %v1197
        %1213 = vmatprep.subr.bf16.mxu0 0
        %1214 = vmatpush1.bf16.msra.mxu0 0
        %1215 = vmatprep.subr.bf16.mxu0 0
        %1216 = vmatpush1.bf16.msra.mxu0 0
        %1217 = vmatprep.subr.bf16.mxu0 0
        %1218 = vmatpush1.bf16.msra.mxu0 0
        %1219 = vmatprep.subr.bf16.mxu0 0
        %1220 = vmatpush1.bf16.msra.mxu0 0
        %1221 = vmatprep.subr.bf16.mxu0 0
        %1222 = vmatpush1.bf16.msra.mxu0 0
        %1223 = vmatprep.subr.bf16.mxu0 0
        %1224 = vmatpush1.bf16.msra.mxu0 0
        %1225 = vmatprep.subr.bf16.mxu0 0
        %1226 = vmatpush1.bf16.msra.mxu0 0
        %1227 = vmatprep.subr.bf16.mxu0 0
        %1228 = vmatpush1.bf16.msra.mxu0 0
        %1229 = vmatprep.subr.bf16.mxu0 0
        %1230 = vmatpush1.bf16.msra.mxu0 0
        %1231 = vmatprep.subr.bf16.mxu0 0
        %1232 = vmatpush1.bf16.msra.mxu0 0
        %1233 = vmatprep.subr.bf16.mxu0 0
        %1234 = vmatpush1.bf16.msra.mxu0 0
        %1235 = vmatprep.subr.bf16.mxu0 0
        %1236 = vmatpush1.bf16.msra.mxu0 0
        %1237 = vmatprep.mubr.bf16.mxu0 0
        %1238 = vmatmul.mubr.bf16.gmra.mrb[0].mxu0 %v1203
        %v1239 = vpop.f32.mrb[0].mxu0
        %v1240 = vadd.f32 0.0, %v1239
        %v1241 = vpop.f32.mrb[0].mxu0
        %v1242 = vpop.f32.mrb[0].mxu0
        %v1243 = vadd.f32 0.0, %v1242
        %v1244 = vpop.f32.mrb[0].mxu0
        %1245 = vdwg.mxu0
        %v1246 = vadd.f32 %v1051, %v1240
        %v1247 = vadd.f32 %v1052, %v1243
        %v1248 = vadd.f32 %v569, %v1246
        %v1249 = vadd.f32 %v570, %v1247
        %1250 = vadd.xlane.f32.xlu0 %v1248
        %v1251 = vpop.xlane.xlu0 %1250
        %1252 = vadd.xlane.f32.xlu0 %v1249
        %v1253 = vpop.xlane.xlu0 %1252
        %v1254 = vrcp.pop 128.0
        %v1255 = vmul.f32 %v1251, %v1254
        %v1256 = vmul.f32 %v1253, %v1254
        %v1257 = vsub.f32 %v1248, %v1255
        %v1258 = vsub.f32 %v1249, %v1256
        %v1259 = vmul.f32 %v1257, %v1257
        %v1260 = vmul.f32 %v1258, %v1258
        %1261 = vadd.xlane.f32.xlu0 %v1259
        %v1262 = vpop.xlane.xlu0 %1261
        %1263 = vadd.xlane.f32.xlu0 %v1260
        %v1264 = vpop.xlane.xlu0 %1263
        %v1265 = vmul.f32 %v1262, %v1254
        %v1266 = vmul.f32 %v1264, %v1254
        %v1267 = vadd.f32 %v1265, 1e-12
        %v1268 = vadd.f32 %v1266, 1e-12
        %v1269 = vrsqrt.pop %v1267
        %v1270 = vrsqrt.pop %v1268
        %v1271 = vmul.f32 %v1257, %v1269
        %v1272 = vmul.f32 %v1258, %v1270
        %v1273 = vlaneseq
        %v1274 = vshrl.u32 %v1273, 7
        %v1275 = vsub.s32 3, %v1274
        %v1276 = vrot.slane %v575, %v1275
        %v1277 = vmul.f32 %v1271, %v1276
        %v1278 = vmul.f32 %v1272, %v1276
        %v1279 = vlaneseq
        %v1280 = vshrl.u32 %v1279, 7
        %v1281 = vsub.s32 4, %v1280
        %v1282 = vrot.slane %v575, %v1281
        %v1283 = vadd.f32 %v1277, %v1282
        %v1284 = vadd.f32 %v1278, %v1282
        %v1285 = vpack.c.bf16 %v1284, %v1283
        %s1286 = smul.u32 %s32, 64
        %s1287 = smul.addr %s1286, 4
        %s1288 = scalar_lea.vmem [#allocation11], %s1287
        %v1289 = vld [vmem:[%s1288] sm:$0xff]
        %v1290 = vld [vmem:[%s1288 + $0x8] sm:$0xff]
        %v1291 = vld [vmem:[%s1288 + $0x10] sm:$0xff]
        %v1292 = vld [vmem:[%s1288 + $0x18] sm:$0xff]
        %v1293 = vld [vmem:[%s1288 + $0x20] sm:$0xff]
        %v1294 = vld [vmem:[%s1288 + $0x28] sm:$0xff]
        %v1295 = vld [vmem:[%s1288 + $0x30] sm:$0xff]
        %v1296 = vld [vmem:[%s1288 + $0x38] sm:$0xff]
        %v1297 = vld [vmem:[%s1288 + $0x40] sm:$0xff]
        %v1298 = vld [vmem:[%s1288 + $0x48] sm:$0xff]
        %v1299 = vld [vmem:[%s1288 + $0x50] sm:$0xff]
        %v1300 = vld [vmem:[%s1288 + $0x58] sm:$0xff]
        %v1301 = vld [vmem:[%s1288 + $0x60] sm:$0xff]
        %v1302 = vld [vmem:[%s1288 + $0x68] sm:$0xff]
        %v1303 = vld [vmem:[%s1288 + $0x70] sm:$0xff]
        %v1304 = vld [vmem:[%s1288 + $0x78] sm:$0xff]
        %v1305 = vld [vmem:[%s1288 + $0x80] sm:$0xff]
        %v1306 = vld [vmem:[%s1288 + $0x88] sm:$0xff]
        %v1307 = vld [vmem:[%s1288 + $0x90] sm:$0xff]
        %v1308 = vld [vmem:[%s1288 + $0x98] sm:$0xff]
        %v1309 = vld [vmem:[%s1288 + $0xa0] sm:$0xff]
        %v1310 = vld [vmem:[%s1288 + $0xa8] sm:$0xff]
        %v1311 = vld [vmem:[%s1288 + $0xb0] sm:$0xff]
        %v1312 = vld [vmem:[%s1288 + $0xb8] sm:$0xff]
        %v1313 = vld [vmem:[%s1288 + $0xc0] sm:$0xff]
        %v1314 = vld [vmem:[%s1288 + $0xc8] sm:$0xff]
        %v1315 = vld [vmem:[%s1288 + $0xd0] sm:$0xff]
        %v1316 = vld [vmem:[%s1288 + $0xd8] sm:$0xff]
        %v1317 = vld [vmem:[%s1288 + $0xe0] sm:$0xff]
        %v1318 = vld [vmem:[%s1288 + $0xe8] sm:$0xff]
        %v1319 = vld [vmem:[%s1288 + $0xf0] sm:$0xff]
        %v1320 = vld [vmem:[%s1288 + $0xf8] sm:$0xff]
        %v1321 = vlaneseq
        %v1322 = vshrl.u32 %v1321, 7
        %v1323 = vsub.s32 1, %v1322
        %v1324 = vrot.slane %v575, %v1323
        %v1325 = vlaneseq
        %v1326 = vshrl.u32 %v1325, 7
        %v1327 = vsub.s32 1, %v1326
        %v1328 = vrot.slane %v576, %v1327
        %v1329 = vlaneseq
        %v1330 = vshrl.u32 %v1329, 7
        %v1331 = vsub.s32 1, %v1330
        %v1332 = vrot.slane %v577, %v1331
        %v1333 = vlaneseq
        %v1334 = vshrl.u32 %v1333, 7
        %v1335 = vsub.s32 1, %v1334
        %v1336 = vrot.slane %v578, %v1335
        %v1369 = vunpack.c.l.b16 %v1289
        %v1370 = vunpack.c.h.b16 %v1289
        %v1371 = vunpack.c.l.b16 %v1290
        %v1372 = vunpack.c.h.b16 %v1290
        %v1373 = vunpack.c.l.b16 %v1291
        %v1374 = vunpack.c.h.b16 %v1291
        %v1375 = vunpack.c.l.b16 %v1292
        %v1376 = vunpack.c.h.b16 %v1292
        %v1377 = vunpack.c.l.b16 %v1293
        %v1378 = vunpack.c.h.b16 %v1293
        %v1379 = vunpack.c.l.b16 %v1294
        %v1380 = vunpack.c.h.b16 %v1294
        %v1381 = vunpack.c.l.b16 %v1295
        %v1382 = vunpack.c.h.b16 %v1295
        %v1383 = vunpack.c.l.b16 %v1296
        %v1384 = vunpack.c.h.b16 %v1296
        %v1385 = vunpack.c.l.b16 %v1297
        %v1386 = vunpack.c.h.b16 %v1297
        %v1387 = vunpack.c.l.b16 %v1298
        %v1388 = vunpack.c.h.b16 %v1298
        %v1389 = vunpack.c.l.b16 %v1299
        %v1390 = vunpack.c.h.b16 %v1299
        %v1391 = vunpack.c.l.b16 %v1300
        %v1392 = vunpack.c.h.b16 %v1300
        %v1393 = vunpack.c.l.b16 %v1301
        %v1394 = vunpack.c.h.b16 %v1301
        %v1395 = vunpack.c.l.b16 %v1302
        %v1396 = vunpack.c.h.b16 %v1302
        %v1397 = vunpack.c.l.b16 %v1303
        %v1398 = vunpack.c.h.b16 %v1303
        %v1399 = vunpack.c.l.b16 %v1304
        %v1400 = vunpack.c.h.b16 %v1304
        %v1401 = vunpack.c.l.b16 %v1305
        %v1402 = vunpack.c.h.b16 %v1305
        %v1403 = vunpack.c.l.b16 %v1306
        %v1404 = vunpack.c.h.b16 %v1306
        %v1405 = vunpack.c.l.b16 %v1307
        %v1406 = vunpack.c.h.b16 %v1307
        %v1407 = vunpack.c.l.b16 %v1308
        %v1408 = vunpack.c.h.b16 %v1308
        %v1409 = vunpack.c.l.b16 %v1309
        %v1410 = vunpack.c.h.b16 %v1309
        %v1411 = vunpack.c.l.b16 %v1310
        %v1412 = vunpack.c.h.b16 %v1310
        %v1413 = vunpack.c.l.b16 %v1311
        %v1414 = vunpack.c.h.b16 %v1311
        %v1415 = vunpack.c.l.b16 %v1312
        %v1416 = vunpack.c.h.b16 %v1312
        %v1417 = vunpack.c.l.b16 %v1313
        %v1418 = vunpack.c.h.b16 %v1313
        %v1419 = vunpack.c.l.b16 %v1314
        %v1420 = vunpack.c.h.b16 %v1314
        %v1421 = vunpack.c.l.b16 %v1315
        %v1422 = vunpack.c.h.b16 %v1315
        %v1423 = vunpack.c.l.b16 %v1316
        %v1424 = vunpack.c.h.b16 %v1316
        %v1425 = vunpack.c.l.b16 %v1317
        %v1426 = vunpack.c.h.b16 %v1317
        %v1427 = vunpack.c.l.b16 %v1318
        %v1428 = vunpack.c.h.b16 %v1318
        %v1429 = vunpack.c.l.b16 %v1319
        %v1430 = vunpack.c.h.b16 %v1319
        %v1431 = vunpack.c.l.b16 %v1320
        %v1432 = vunpack.c.h.b16 %v1320
        %v1433 = vpack.c.b16 %v1373, %v1369
        %v1434 = vpack.c.b16 %v1374, %v1370
        %v1435 = vpack.c.b16 %v1375, %v1371
        %v1436 = vpack.c.b16 %v1376, %v1372
        %v1437 = vpack.c.b16 %v1381, %v1377
        %v1438 = vpack.c.b16 %v1382, %v1378
        %v1439 = vpack.c.b16 %v1383, %v1379
        %v1440 = vpack.c.b16 %v1384, %v1380
        %v1441 = vpack.c.b16 %v1389, %v1385
        %v1442 = vpack.c.b16 %v1390, %v1386
        %v1443 = vpack.c.b16 %v1391, %v1387
        %v1444 = vpack.c.b16 %v1392, %v1388
        %v1445 = vpack.c.b16 %v1397, %v1393
        %v1446 = vpack.c.b16 %v1398, %v1394
        %v1447 = vpack.c.b16 %v1399, %v1395
        %v1448 = vpack.c.b16 %v1400, %v1396
        %v1449 = vpack.c.b16 %v1405, %v1401
        %v1450 = vpack.c.b16 %v1406, %v1402
        %v1451 = vpack.c.b16 %v1407, %v1403
        %v1452 = vpack.c.b16 %v1408, %v1404
        %v1453 = vpack.c.b16 %v1413, %v1409
        %v1454 = vpack.c.b16 %v1414, %v1410
        %v1455 = vpack.c.b16 %v1415, %v1411
        %v1456 = vpack.c.b16 %v1416, %v1412
        %v1457 = vpack.c.b16 %v1421, %v1417
        %v1458 = vpack.c.b16 %v1422, %v1418
        %v1459 = vpack.c.b16 %v1423, %v1419
        %v1460 = vpack.c.b16 %v1424, %v1420
        %v1461 = vpack.c.b16 %v1429, %v1425
        %v1462 = vpack.c.b16 %v1430, %v1426
        %v1463 = vpack.c.b16 %v1431, %v1427
        %v1464 = vpack.c.b16 %v1432, %v1428
        %1497 = vmatprep.subr.bf16.mxu0 %v1434
        %1498 = vmatpush1.bf16.msra.mxu0 %v1433
        %1499 = vmatprep.subr.bf16.mxu0 %v1438
        %1500 = vmatpush1.bf16.msra.mxu0 %v1437
        %1501 = vmatprep.subr.bf16.mxu0 %v1442
        %1502 = vmatpush1.bf16.msra.mxu0 %v1441
        %1503 = vmatprep.subr.bf16.mxu0 %v1446
        %1504 = vmatpush1.bf16.msra.mxu0 %v1445
        %1505 = vmatprep.subr.bf16.mxu0 %v1450
        %1506 = vmatpush1.bf16.msra.mxu0 %v1449
        %1507 = vmatprep.subr.bf16.mxu0 %v1454
        %1508 = vmatpush1.bf16.msra.mxu0 %v1453
        %1509 = vmatprep.subr.bf16.mxu0 %v1458
        %1510 = vmatpush1.bf16.msra.mxu0 %v1457
        %1511 = vmatprep.subr.bf16.mxu0 %v1462
        %1512 = vmatpush1.bf16.msra.mxu0 %v1461
        %1513 = vmatprep.subr.bf16.mxu0 0
        %1514 = vmatpush1.bf16.msra.mxu0 0
        %1515 = vmatprep.subr.bf16.mxu0 0
        %1516 = vmatpush1.bf16.msra.mxu0 0
        %1517 = vmatprep.subr.bf16.mxu0 0
        %1518 = vmatpush1.bf16.msra.mxu0 0
        %1519 = vmatprep.subr.bf16.mxu0 0
        %1520 = vmatpush1.bf16.msra.mxu0 0
        %1521 = vmatprep.subr.bf16.mxu0 0
        %1522 = vmatpush1.bf16.msra.mxu0 0
        %1523 = vmatprep.subr.bf16.mxu0 0
        %1524 = vmatpush1.bf16.msra.mxu0 0
        %1525 = vmatprep.subr.bf16.mxu0 0
        %1526 = vmatpush1.bf16.msra.mxu0 0
        %1527 = vmatprep.subr.bf16.mxu0 0
        %1528 = vmatpush1.bf16.msra.mxu0 0
        %1529 = vmatprep.mubr.bf16.mxu0 0
        %1530 = vmatmul.mubr.bf16.gmra.mrb[0].mxu0 %v1285
        %v1531 = vpop.f32.mrb[0].mxu0
        %v1532 = vadd.f32 %v1324, %v1531
        %v1533 = vpop.f32.mrb[0].mxu0
        %v1534 = vadd.f32 %v1328, %v1533
        %v1535 = vpop.f32.mrb[0].mxu0
        %v1536 = vadd.f32 %v1324, %v1535
        %v1537 = vpop.f32.mrb[0].mxu0
        %v1538 = vadd.f32 %v1328, %v1537
        %1539 = vdwg.mxu0
        %1540 = vmatprep.subr.bf16.mxu0 %v1436
        %1541 = vmatpush1.bf16.msra.mxu0 %v1435
        %1542 = vmatprep.subr.bf16.mxu0 %v1440
        %1543 = vmatpush1.bf16.msra.mxu0 %v1439
        %1544 = vmatprep.subr.bf16.mxu0 %v1444
        %1545 = vmatpush1.bf16.msra.mxu0 %v1443
        %1546 = vmatprep.subr.bf16.mxu0 %v1448
        %1547 = vmatpush1.bf16.msra.mxu0 %v1447
        %1548 = vmatprep.subr.bf16.mxu0 %v1452
        %1549 = vmatpush1.bf16.msra.mxu0 %v1451
        %1550 = vmatprep.subr.bf16.mxu0 %v1456
        %1551 = vmatpush1.bf16.msra.mxu0 %v1455
        %1552 = vmatprep.subr.bf16.mxu0 %v1460
        %1553 = vmatpush1.bf16.msra.mxu0 %v1459
        %1554 = vmatprep.subr.bf16.mxu0 %v1464
        %1555 = vmatpush1.bf16.msra.mxu0 %v1463
        %1556 = vmatprep.subr.bf16.mxu0 0
        %1557 = vmatpush1.bf16.msra.mxu0 0
        %1558 = vmatprep.subr.bf16.mxu0 0
        %1559 = vmatpush1.bf16.msra.mxu0 0
        %1560 = vmatprep.subr.bf16.mxu0 0
        %1561 = vmatpush1.bf16.msra.mxu0 0
        %1562 = vmatprep.subr.bf16.mxu0 0
        %1563 = vmatpush1.bf16.msra.mxu0 0
        %1564 = vmatprep.subr.bf16.mxu0 0
        %1565 = vmatpush1.bf16.msra.mxu0 0
        %1566 = vmatprep.subr.bf16.mxu0 0
        %1567 = vmatpush1.bf16.msra.mxu0 0
        %1568 = vmatprep.subr.bf16.mxu0 0
        %1569 = vmatpush1.bf16.msra.mxu0 0
        %1570 = vmatprep.subr.bf16.mxu0 0
        %1571 = vmatpush1.bf16.msra.mxu0 0
        %1572 = vmatprep.mubr.bf16.mxu0 0
        %1573 = vmatmul.mubr.bf16.gmra.mrb[0].mxu0 %v1285
        %v1574 = vpop.f32.mrb[0].mxu0
        %v1575 = vadd.f32 %v1332, %v1574
        %v1576 = vpop.f32.mrb[0].mxu0
        %v1577 = vadd.f32 %v1336, %v1576
        %v1578 = vpop.f32.mrb[0].mxu0
        %v1579 = vadd.f32 %v1332, %v1578
        %v1580 = vpop.f32.mrb[0].mxu0
        %v1581 = vadd.f32 %v1336, %v1580
        %1582 = vdwg.mxu0
        %v1583 = vmul.f32 %v1532, 0.5
        %v1584 = vmul.f32 %v1534, 0.5
        %v1585 = vmul.f32 %v1575, 0.5
        %v1586 = vmul.f32 %v1577, 0.5
        %v1587 = vmul.f32 %v1536, 0.5
        %v1588 = vmul.f32 %v1538, 0.5
        %v1589 = vmul.f32 %v1579, 0.5
        %v1590 = vmul.f32 %v1581, 0.5
        %v1591 = vmul.f32 %v1532, 0.044715
        %v1592 = vmul.f32 %v1534, 0.044715
        %v1593 = vmul.f32 %v1575, 0.044715
        %v1594 = vmul.f32 %v1577, 0.044715
        %v1595 = vmul.f32 %v1536, 0.044715
        %v1596 = vmul.f32 %v1538, 0.044715
        %v1597 = vmul.f32 %v1579, 0.044715
        %v1598 = vmul.f32 %v1581, 0.044715
        %v1599 = vmul.f32 %v1591, %v1532
        %v1600 = vmul.f32 %v1592, %v1534
        %v1601 = vmul.f32 %v1593, %v1575
        %v1602 = vmul.f32 %v1594, %v1577
        %v1603 = vmul.f32 %v1595, %v1536
        %v1604 = vmul.f32 %v1596, %v1538
        %v1605 = vmul.f32 %v1597, %v1579
        %v1606 = vmul.f32 %v1598, %v1581
        %v1607 = vmul.f32 %v1599, %v1532
        %v1608 = vmul.f32 %v1600, %v1534
        %v1609 = vmul.f32 %v1601, %v1575
        %v1610 = vmul.f32 %v1602, %v1577
        %v1611 = vmul.f32 %v1603, %v1536
        %v1612 = vmul.f32 %v1604, %v1538
        %v1613 = vmul.f32 %v1605, %v1579
        %v1614 = vmul.f32 %v1606, %v1581
        %v1615 = vadd.f32 %v1532, %v1607
        %v1616 = vadd.f32 %v1534, %v1608
        %v1617 = vadd.f32 %v1575, %v1609
        %v1618 = vadd.f32 %v1577, %v1610
        %v1619 = vadd.f32 %v1536, %v1611
        %v1620 = vadd.f32 %v1538, %v1612
        %v1621 = vadd.f32 %v1579, %v1613
        %v1622 = vadd.f32 %v1581, %v1614
        %v1623 = vmul.f32 %v1615, 0.7978846
        %v1624 = vmul.f32 %v1616, 0.7978846
        %v1625 = vmul.f32 %v1617, 0.7978846
        %v1626 = vmul.f32 %v1618, 0.7978846
        %v1627 = vmul.f32 %v1619, 0.7978846
        %v1628 = vmul.f32 %v1620, 0.7978846
        %v1629 = vmul.f32 %v1621, 0.7978846
        %v1630 = vmul.f32 %v1622, 0.7978846
        %v1631 = vtanh.pop %v1623
        %v1632 = vtanh.pop %v1624
        %v1633 = vtanh.pop %v1625
        %v1634 = vtanh.pop %v1626
        %v1635 = vtanh.pop %v1627
        %v1636 = vtanh.pop %v1628
        %v1637 = vtanh.pop %v1629
        %v1638 = vtanh.pop %v1630
        %v1639 = vadd.f32 %v1631, 1.0
        %v1640 = vadd.f32 %v1632, 1.0
        %v1641 = vadd.f32 %v1633, 1.0
        %v1642 = vadd.f32 %v1634, 1.0
        %v1643 = vadd.f32 %v1635, 1.0
        %v1644 = vadd.f32 %v1636, 1.0
        %v1645 = vadd.f32 %v1637, 1.0
        %v1646 = vadd.f32 %v1638, 1.0
        %v1647 = vmul.f32 %v1583, %v1639
        %v1648 = vmul.f32 %v1584, %v1640
        %v1649 = vmul.f32 %v1585, %v1641
        %v1650 = vmul.f32 %v1586, %v1642
        %v1651 = vmul.f32 %v1587, %v1643
        %v1652 = vmul.f32 %v1588, %v1644
        %v1653 = vmul.f32 %v1589, %v1645
        %v1654 = vmul.f32 %v1590, %v1646
        %v1655 = vpack.c.bf16 %v1651, %v1647
        %v1656 = vpack.c.bf16 %v1652, %v1648
        %v1657 = vpack.c.bf16 %v1653, %v1649
        %v1658 = vpack.c.bf16 %v1654, %v1650
        %s1659 = smul.addr %s1286, 4
        %s1660 = scalar_lea.vmem [#allocation12], %s1659
        %v1661 = vld [vmem:[%s1660] sm:$0xf]
        %v1662 = vld [vmem:[%s1660 + $0x4] sm:$0xf]
        %v1663 = vld [vmem:[%s1660 + $0x8] sm:$0xf]
        %v1664 = vld [vmem:[%s1660 + $0xc] sm:$0xf]
        %v1665 = vld [vmem:[%s1660 + $0x10] sm:$0xf]
        %v1666 = vld [vmem:[%s1660 + $0x14] sm:$0xf]
        %v1667 = vld [vmem:[%s1660 + $0x18] sm:$0xf]
        %v1668 = vld [vmem:[%s1660 + $0x1c] sm:$0xf]
        %v1669 = vld [vmem:[%s1660 + $0x20] sm:$0xf]
        %v1670 = vld [vmem:[%s1660 + $0x24] sm:$0xf]
        %v1671 = vld [vmem:[%s1660 + $0x28] sm:$0xf]
        %v1672 = vld [vmem:[%s1660 + $0x2c] sm:$0xf]
        %v1673 = vld [vmem:[%s1660 + $0x30] sm:$0xf]
        %v1674 = vld [vmem:[%s1660 + $0x34] sm:$0xf]
        %v1675 = vld [vmem:[%s1660 + $0x38] sm:$0xf]
        %v1676 = vld [vmem:[%s1660 + $0x3c] sm:$0xf]
        %v1677 = vld [vmem:[%s1660 + $0x40] sm:$0xf]
        %v1678 = vld [vmem:[%s1660 + $0x44] sm:$0xf]
        %v1679 = vld [vmem:[%s1660 + $0x48] sm:$0xf]
        %v1680 = vld [vmem:[%s1660 + $0x4c] sm:$0xf]
        %v1681 = vld [vmem:[%s1660 + $0x50] sm:$0xf]
        %v1682 = vld [vmem:[%s1660 + $0x54] sm:$0xf]
        %v1683 = vld [vmem:[%s1660 + $0x58] sm:$0xf]
        %v1684 = vld [vmem:[%s1660 + $0x5c] sm:$0xf]
        %v1685 = vld [vmem:[%s1660 + $0x60] sm:$0xf]
        %v1686 = vld [vmem:[%s1660 + $0x64] sm:$0xf]
        %v1687 = vld [vmem:[%s1660 + $0x68] sm:$0xf]
        %v1688 = vld [vmem:[%s1660 + $0x6c] sm:$0xf]
        %v1689 = vld [vmem:[%s1660 + $0x70] sm:$0xf]
        %v1690 = vld [vmem:[%s1660 + $0x74] sm:$0xf]
        %v1691 = vld [vmem:[%s1660 + $0x78] sm:$0xf]
        %v1692 = vld [vmem:[%s1660 + $0x7c] sm:$0xf]
        %v1693 = vld [vmem:[%s1660 + $0x80] sm:$0xf]
        %v1694 = vld [vmem:[%s1660 + $0x84] sm:$0xf]
        %v1695 = vld [vmem:[%s1660 + $0x88] sm:$0xf]
        %v1696 = vld [vmem:[%s1660 + $0x8c] sm:$0xf]
        %v1697 = vld [vmem:[%s1660 + $0x90] sm:$0xf]
        %v1698 = vld [vmem:[%s1660 + $0x94] sm:$0xf]
        %v1699 = vld [vmem:[%s1660 + $0x98] sm:$0xf]
        %v1700 = vld [vmem:[%s1660 + $0x9c] sm:$0xf]
        %v1701 = vld [vmem:[%s1660 + $0xa0] sm:$0xf]
        %v1702 = vld [vmem:[%s1660 + $0xa4] sm:$0xf]
        %v1703 = vld [vmem:[%s1660 + $0xa8] sm:$0xf]
        %v1704 = vld [vmem:[%s1660 + $0xac] sm:$0xf]
        %v1705 = vld [vmem:[%s1660 + $0xb0] sm:$0xf]
        %v1706 = vld [vmem:[%s1660 + $0xb4] sm:$0xf]
        %v1707 = vld [vmem:[%s1660 + $0xb8] sm:$0xf]
        %v1708 = vld [vmem:[%s1660 + $0xbc] sm:$0xf]
        %v1709 = vld [vmem:[%s1660 + $0xc0] sm:$0xf]
        %v1710 = vld [vmem:[%s1660 + $0xc4] sm:$0xf]
        %v1711 = vld [vmem:[%s1660 + $0xc8] sm:$0xf]
        %v1712 = vld [vmem:[%s1660 + $0xcc] sm:$0xf]
        %v1713 = vld [vmem:[%s1660 + $0xd0] sm:$0xf]
        %v1714 = vld [vmem:[%s1660 + $0xd4] sm:$0xf]
        %v1715 = vld [vmem:[%s1660 + $0xd8] sm:$0xf]
        %v1716 = vld [vmem:[%s1660 + $0xdc] sm:$0xf]
        %v1717 = vld [vmem:[%s1660 + $0xe0] sm:$0xf]
        %v1718 = vld [vmem:[%s1660 + $0xe4] sm:$0xf]
        %v1719 = vld [vmem:[%s1660 + $0xe8] sm:$0xf]
        %v1720 = vld [vmem:[%s1660 + $0xec] sm:$0xf]
        %v1721 = vld [vmem:[%s1660 + $0xf0] sm:$0xf]
        %v1722 = vld [vmem:[%s1660 + $0xf4] sm:$0xf]
        %v1723 = vld [vmem:[%s1660 + $0xf8] sm:$0xf]
        %v1724 = vld [vmem:[%s1660 + $0xfc] sm:$0xf]
        %v1725 = vlaneseq
        %v1726 = vshrl.u32 %v1725, 7
        %v1727 = vsub.s32 5, %v1726
        %v1728 = vrot.slane %v575, %v1727
        %v1793 = vunpack.c.l.b16 %v1661
        %v1794 = vunpack.c.l.b16 %v1662
        %v1795 = vunpack.c.l.b16 %v1663
        %v1796 = vunpack.c.l.b16 %v1664
        %v1797 = vunpack.c.l.b16 %v1665
        %v1798 = vunpack.c.l.b16 %v1666
        %v1799 = vunpack.c.l.b16 %v1667
        %v1800 = vunpack.c.l.b16 %v1668
        %v1801 = vunpack.c.l.b16 %v1669
        %v1802 = vunpack.c.l.b16 %v1670
        %v1803 = vunpack.c.l.b16 %v1671
        %v1804 = vunpack.c.l.b16 %v1672
        %v1805 = vunpack.c.l.b16 %v1673
        %v1806 = vunpack.c.l.b16 %v1674
        %v1807 = vunpack.c.l.b16 %v1675
        %v1808 = vunpack.c.l.b16 %v1676
        %v1809 = vunpack.c.l.b16 %v1677
        %v1810 = vunpack.c.l.b16 %v1678
        %v1811 = vunpack.c.l.b16 %v1679
        %v1812 = vunpack.c.l.b16 %v1680
        %v1813 = vunpack.c.l.b16 %v1681
        %v1814 = vunpack.c.l.b16 %v1682
        %v1815 = vunpack.c.l.b16 %v1683
        %v1816 = vunpack.c.l.b16 %v1684
        %v1817 = vunpack.c.l.b16 %v1685
        %v1818 = vunpack.c.l.b16 %v1686
        %v1819 = vunpack.c.l.b16 %v1687
        %v1820 = vunpack.c.l.b16 %v1688
        %v1821 = vunpack.c.l.b16 %v1689
        %v1822 = vunpack.c.l.b16 %v1690
        %v1823 = vunpack.c.l.b16 %v1691
        %v1824 = vunpack.c.l.b16 %v1692
        %v1825 = vunpack.c.l.b16 %v1693
        %v1826 = vunpack.c.l.b16 %v1694
        %v1827 = vunpack.c.l.b16 %v1695
        %v1828 = vunpack.c.l.b16 %v1696
        %v1829 = vunpack.c.l.b16 %v1697
        %v1830 = vunpack.c.l.b16 %v1698
        %v1831 = vunpack.c.l.b16 %v1699
        %v1832 = vunpack.c.l.b16 %v1700
        %v1833 = vunpack.c.l.b16 %v1701
        %v1834 = vunpack.c.l.b16 %v1702
        %v1835 = vunpack.c.l.b16 %v1703
        %v1836 = vunpack.c.l.b16 %v1704
        %v1837 = vunpack.c.l.b16 %v1705
        %v1838 = vunpack.c.l.b16 %v1706
        %v1839 = vunpack.c.l.b16 %v1707
        %v1840 = vunpack.c.l.b16 %v1708
        %v1841 = vunpack.c.l.b16 %v1709
        %v1842 = vunpack.c.l.b16 %v1710
        %v1843 = vunpack.c.l.b16 %v1711
        %v1844 = vunpack.c.l.b16 %v1712
        %v1845 = vunpack.c.l.b16 %v1713
        %v1846 = vunpack.c.l.b16 %v1714
        %v1847 = vunpack.c.l.b16 %v1715
        %v1848 = vunpack.c.l.b16 %v1716
        %v1849 = vunpack.c.l.b16 %v1717
        %v1850 = vunpack.c.l.b16 %v1718
        %v1851 = vunpack.c.l.b16 %v1719
        %v1852 = vunpack.c.l.b16 %v1720
        %v1853 = vunpack.c.l.b16 %v1721
        %v1854 = vunpack.c.l.b16 %v1722
        %v1855 = vunpack.c.l.b16 %v1723
        %v1856 = vunpack.c.l.b16 %v1724
        %v1857 = vpack.c.b16 %v1794, %v1793
        %v1858 = vpack.c.b16 %v1796, %v1795
        %v1859 = vpack.c.b16 %v1798, %v1797
        %v1860 = vpack.c.b16 %v1800, %v1799
        %v1861 = vpack.c.b16 %v1802, %v1801
        %v1862 = vpack.c.b16 %v1804, %v1803
        %v1863 = vpack.c.b16 %v1806, %v1805
        %v1864 = vpack.c.b16 %v1808, %v1807
        %v1865 = vpack.c.b16 %v1810, %v1809
        %v1866 = vpack.c.b16 %v1812, %v1811
        %v1867 = vpack.c.b16 %v1814, %v1813
        %v1868 = vpack.c.b16 %v1816, %v1815
        %v1869 = vpack.c.b16 %v1818, %v1817
        %v1870 = vpack.c.b16 %v1820, %v1819
        %v1871 = vpack.c.b16 %v1822, %v1821
        %v1872 = vpack.c.b16 %v1824, %v1823
        %v1873 = vpack.c.b16 %v1826, %v1825
        %v1874 = vpack.c.b16 %v1828, %v1827
        %v1875 = vpack.c.b16 %v1830, %v1829
        %v1876 = vpack.c.b16 %v1832, %v1831
        %v1877 = vpack.c.b16 %v1834, %v1833
        %v1878 = vpack.c.b16 %v1836, %v1835
        %v1879 = vpack.c.b16 %v1838, %v1837
        %v1880 = vpack.c.b16 %v1840, %v1839
        %v1881 = vpack.c.b16 %v1842, %v1841
        %v1882 = vpack.c.b16 %v1844, %v1843
        %v1883 = vpack.c.b16 %v1846, %v1845
        %v1884 = vpack.c.b16 %v1848, %v1847
        %v1885 = vpack.c.b16 %v1850, %v1849
        %v1886 = vpack.c.b16 %v1852, %v1851
        %v1887 = vpack.c.b16 %v1854, %v1853
        %v1888 = vpack.c.b16 %v1856, %v1855
        %1921 = vmatprep.subr.bf16.mxu0 0
        %1922 = vmatpush1.bf16.msra.mxu0 %v1857
        %1923 = vmatprep.subr.bf16.mxu0 0
        %1924 = vmatpush1.bf16.msra.mxu0 %v1858
        %1925 = vmatprep.subr.bf16.mxu0 0
        %1926 = vmatpush1.bf16.msra.mxu0 %v1859
        %1927 = vmatprep.subr.bf16.mxu0 0
        %1928 = vmatpush1.bf16.msra.mxu0 %v1860
        %1929 = vmatprep.subr.bf16.mxu0 0
        %1930 = vmatpush1.bf16.msra.mxu0 %v1861
        %1931 = vmatprep.subr.bf16.mxu0 0
        %1932 = vmatpush1.bf16.msra.mxu0 %v1862
        %1933 = vmatprep.subr.bf16.mxu0 0
        %1934 = vmatpush1.bf16.msra.mxu0 %v1863
        %1935 = vmatprep.subr.bf16.mxu0 0
        %1936 = vmatpush1.bf16.msra.mxu0 %v1864
        %1937 = vmatprep.subr.bf16.mxu0 0
        %1938 = vmatpush1.bf16.msra.mxu0 %v1865
        %1939 = vmatprep.subr.bf16.mxu0 0
        %1940 = vmatpush1.bf16.msra.mxu0 %v1866
        %1941 = vmatprep.subr.bf16.mxu0 0
        %1942 = vmatpush1.bf16.msra.mxu0 %v1867
        %1943 = vmatprep.subr.bf16.mxu0 0
        %1944 = vmatpush1.bf16.msra.mxu0 %v1868
        %1945 = vmatprep.subr.bf16.mxu0 0
        %1946 = vmatpush1.bf16.msra.mxu0 %v1869
        %1947 = vmatprep.subr.bf16.mxu0 0
        %1948 = vmatpush1.bf16.msra.mxu0 %v1870
        %1949 = vmatprep.subr.bf16.mxu0 0
        %1950 = vmatpush1.bf16.msra.mxu0 %v1871
        %1951 = vmatprep.subr.bf16.mxu0 0
        %1952 = vmatpush1.bf16.msra.mxu0 %v1872
        %1953 = vmatprep.mubr.bf16.mxu0 %v1656
        %1954 = vmatmul.mubr.bf16.gmra.mrb[0].mxu0 %v1655
        %v1955 = vpop.f32.mrb[0].mxu0
        %v1956 = vadd.f32 %v1728, %v1955
        %v1957 = vpop.f32.mrb[0].mxu0
        %v1958 = vpop.f32.mrb[0].mxu0
        %v1959 = vadd.f32 %v1728, %v1958
        %v1960 = vpop.f32.mrb[0].mxu0
        %1961 = vdwg.mxu0
        %1962 = vmatprep.subr.bf16.mxu0 0
        %1963 = vmatpush1.bf16.msra.mxu0 %v1873
        %1964 = vmatprep.subr.bf16.mxu0 0
        %1965 = vmatpush1.bf16.msra.mxu0 %v1874
        %1966 = vmatprep.subr.bf16.mxu0 0
        %1967 = vmatpush1.bf16.msra.mxu0 %v1875
        %1968 = vmatprep.subr.bf16.mxu0 0
        %1969 = vmatpush1.bf16.msra.mxu0 %v1876
        %1970 = vmatprep.subr.bf16.mxu0 0
        %1971 = vmatpush1.bf16.msra.mxu0 %v1877
        %1972 = vmatprep.subr.bf16.mxu0 0
        %1973 = vmatpush1.bf16.msra.mxu0 %v1878
        %1974 = vmatprep.subr.bf16.mxu0 0
        %1975 = vmatpush1.bf16.msra.mxu0 %v1879
        %1976 = vmatprep.subr.bf16.mxu0 0
        %1977 = vmatpush1.bf16.msra.mxu0 %v1880
        %1978 = vmatprep.subr.bf16.mxu0 0
        %1979 = vmatpush1.bf16.msra.mxu0 %v1881
        %1980 = vmatprep.subr.bf16.mxu0 0
        %1981 = vmatpush1.bf16.msra.mxu0 %v1882
        %1982 = vmatprep.subr.bf16.mxu0 0
        %1983 = vmatpush1.bf16.msra.mxu0 %v1883
        %1984 = vmatprep.subr.bf16.mxu0 0
        %1985 = vmatpush1.bf16.msra.mxu0 %v1884
        %1986 = vmatprep.subr.bf16.mxu0 0
        %1987 = vmatpush1.bf16.msra.mxu0 %v1885
        %1988 = vmatprep.subr.bf16.mxu0 0
        %1989 = vmatpush1.bf16.msra.mxu0 %v1886
        %1990 = vmatprep.subr.bf16.mxu0 0
        %1991 = vmatpush1.bf16.msra.mxu0 %v1887
        %1992 = vmatprep.subr.bf16.mxu0 0
        %1993 = vmatpush1.bf16.msra.mxu0 %v1888
        %1994 = vmatprep.mubr.bf16.mxu0 %v1658
        %1995 = vmatmul.mubr.bf16.gmra.mrb[0].mxu0 %v1657
        %v1996 = vpop.f32.mrb[0].mxu0
        %v1997 = vadd.f32 %v1956, %v1996
        %v1998 = vpop.f32.mrb[0].mxu0
        %v1999 = vpop.f32.mrb[0].mxu0
        %v2000 = vadd.f32 %v1959, %v1999
        %v2001 = vpop.f32.mrb[0].mxu0
        %2002 = vdwg.mxu0
        %v2003 = vadd.f32 %v1283, %v1997
        %v2004 = vadd.f32 %v1284, %v2000
        %2005 = vadd.xlane.f32.xlu0 %v2003
        %v2006 = vpop.xlane.xlu0 %2005
        %2007 = vadd.xlane.f32.xlu0 %v2004
        %v2008 = vpop.xlane.xlu0 %2007
        %v2009 = vmul.f32 %v2006, %v1254
        %v2010 = vmul.f32 %v2008, %v1254
        %v2011 = vsub.f32 %v2003, %v2009
        %v2012 = vsub.f32 %v2004, %v2010
        %v2013 = vmul.f32 %v2011, %v2011
        %v2014 = vmul.f32 %v2012, %v2012
        %2015 = vadd.xlane.f32.xlu0 %v2013
        %v2016 = vpop.xlane.xlu0 %2015
        %2017 = vadd.xlane.f32.xlu0 %v2014
        %v2018 = vpop.xlane.xlu0 %2017
        %v2019 = vmul.f32 %v2016, %v1254
        %v2020 = vmul.f32 %v2018, %v1254
        %v2021 = vadd.f32 %v2019, 1e-12
        %v2022 = vadd.f32 %v2020, 1e-12
        %v2023 = vrsqrt.pop %v2021
        %v2024 = vrsqrt.pop %v2022
        %v2025 = vmul.f32 %v2011, %v2023
        %v2026 = vmul.f32 %v2012, %v2024
        %v2027 = vlaneseq
        %v2028 = vshrl.u32 %v2027, 7
        %v2029 = vsub.s32 6, %v2028
        %v2030 = vrot.slane %v575, %v2029
        %v2031 = vmul.f32 %v2025, %v2030
        %v2032 = vmul.f32 %v2026, %v2030
        %v2033 = vlaneseq
        %v2034 = vshrl.u32 %v2033, 7
        %v2035 = vsub.s32 7, %v2034
        %v2036 = vrot.slane %v575, %v2035
        %v2037 = vadd.f32 %v2031, %v2036
        %v2038 = vadd.f32 %v2032, %v2036
        %2039 = vst [vmem:[#allocation2] sm:$0xff] %v2037
        %2040 = vst [vmem:[#allocation2 + $0x8] sm:$0xff] %v2038
        %p2041 = scmp.eq.s32.totalorder %s32, 1
        // Predicated region
        $region105: #{tpu_custom_call.1} parent=67 // pred_check
          %p2042 = pneg %p2041
        $region106: #{tpu_custom_call.1} parent=67 // pred_check_branch
          %2044 = sbr.rel (%p2042) target = $region108
        $region107: #{tpu_custom_call.1} parent=67 // pred_region
          %v2045 = vpack.c.bf16 %v2038, %v2037
          %v2046 = vld [vmem:[%s2] sm:$0x3]
          %v2048 = vsel %vm910, %v2046, 0
          %2050 = vmatprep.subr.bf16.mxu0 0
          %2051 = vmatpush1.bf16.msra.mxu0 %v2045
          %2052 = vmatprep.subr.bf16.mxu0 0
          %2053 = vmatpush1.bf16.msra.mxu0 0
          %2054 = vmatprep.subr.bf16.mxu0 0
          %2055 = vmatpush1.bf16.msra.mxu0 0
          %2056 = vmatprep.subr.bf16.mxu0 0
          %2057 = vmatpush1.bf16.msra.mxu0 0
          %2058 = vmatprep.subr.bf16.mxu0 0
          %2059 = vmatpush1.bf16.msra.mxu0 0
          %2060 = vmatprep.subr.bf16.mxu0 0
          %2061 = vmatpush1.bf16.msra.mxu0 0
          %2062 = vmatprep.subr.bf16.mxu0 0
          %2063 = vmatpush1.bf16.msra.mxu0 0
          %2064 = vmatprep.subr.bf16.mxu0 0
          %2065 = vmatpush1.bf16.msra.mxu0 0
          %2066 = vmatprep.subr.bf16.mxu0 0
          %2067 = vmatpush1.bf16.msra.mxu0 0
          %2068 = vmatprep.subr.bf16.mxu0 0
          %2069 = vmatpush1.bf16.msra.mxu0 0
          %2070 = vmatprep.subr.bf16.mxu0 0
          %2071 = vmatpush1.bf16.msra.mxu0 0
          %2072 = vmatprep.subr.bf16.mxu0 0
          %2073 = vmatpush1.bf16.msra.mxu0 0
          %2074 = vmatprep.subr.bf16.mxu0 0
          %2075 = vmatpush1.bf16.msra.mxu0 0
          %2076 = vmatprep.subr.bf16.mxu0 0
          %2077 = vmatpush1.bf16.msra.mxu0 0
          %2078 = vmatprep.subr.bf16.mxu0 0
          %2079 = vmatpush1.bf16.msra.mxu0 0
          %2080 = vmatprep.subr.bf16.mxu0 0
          %2081 = vmatpush1.bf16.msra.mxu0 0
          %2082 = vmatprep.mubr.bf16.mxu0 0
          %2083 = vmatmul.mubr.bf16.gmra.mrb[0].mxu0 %v2048
          %v2084 = vpop.f32.mrb[0].mxu0
          %v2085 = vadd.f32 0.0, %v2084
          %v2086 = vpop.f32.mrb[0].mxu0
          %v2087 = vpop.f32.mrb[0].mxu0
          %v2088 = vpop.f32.mrb[0].mxu0
          %2089 = vdwg.mxu0
          %2090 = vst [vmem:[#allocation18] sm:$0xf] %v2085
          %v2091 = vld [vmem:[%s3] sm:$0x1]
          %v2093 = vsel %vm910, %v2091, 0
          %2095 = vmatprep.subr.bf16.mxu0 0
          %2096 = vmatpush1.bf16.msra.mxu0 %v2045
          %2097 = vmatprep.subr.bf16.mxu0 0
          %2098 = vmatpush1.bf16.msra.mxu0 0
          %2099 = vmatprep.subr.bf16.mxu0 0
          %2100 = vmatpush1.bf16.msra.mxu0 0
          %2101 = vmatprep.subr.bf16.mxu0 0
          %2102 = vmatpush1.bf16.msra.mxu0 0
          %2103 = vmatprep.subr.bf16.mxu0 0
          %2104 = vmatpush1.bf16.msra.mxu0 0
          %2105 = vmatprep.subr.bf16.mxu0 0
          %2106 = vmatpush1.bf16.msra.mxu0 0
          %2107 = vmatprep.subr.bf16.mxu0 0
          %2108 = vmatpush1.bf16.msra.mxu0 0
          %2109 = vmatprep.subr.bf16.mxu0 0
          %2110 = vmatpush1.bf16.msra.mxu0 0
          %2111 = vmatprep.subr.bf16.mxu0 0
          %2112 = vmatpush1.bf16.msra.mxu0 0
          %2113 = vmatprep.subr.bf16.mxu0 0
          %2114 = vmatpush1.bf16.msra.mxu0 0
          %2115 = vmatprep.subr.bf16.mxu0 0
          %2116 = vmatpush1.bf16.msra.mxu0 0
          %2117 = vmatprep.subr.bf16.mxu0 0
          %2118 = vmatpush1.bf16.msra.mxu0 0
          %2119 = vmatprep.subr.bf16.mxu0 0
          %2120 = vmatpush1.bf16.msra.mxu0 0
          %2121 = vmatprep.subr.bf16.mxu0 0
          %2122 = vmatpush1.bf16.msra.mxu0 0
          %2123 = vmatprep.subr.bf16.mxu0 0
          %2124 = vmatpush1.bf16.msra.mxu0 0
          %2125 = vmatprep.subr.bf16.mxu0 0
          %2126 = vmatpush1.bf16.msra.mxu0 0
          %2127 = vmatprep.mubr.bf16.mxu0 0
          %2128 = vmatmul.mubr.bf16.gmra.mrb[0].mxu0 %v2093
          %v2129 = vpop.f32.mrb[0].mxu0
          %v2130 = vadd.f32 0.0, %v2129
          %v2131 = vpop.f32.mrb[0].mxu0
          %v2132 = vpop.f32.mrb[0].mxu0
          %v2133 = vpop.f32.mrb[0].mxu0
          %2134 = vdwg.mxu0
          %v2135 = vpack.c.bf16 %v2130, %v2130
          %v2136 = vld [vmem:[#allocation15] sm:$0xf]
          %v2137 = vld [vmem:[#allocation15 + $0x4] sm:$0xf]
          %v2138 = vld [vmem:[#allocation15 + $0x8] sm:$0xf]
          %v2139 = vld [vmem:[#allocation15 + $0xc] sm:$0xf]
          %v2140 = vld [vmem:[#allocation15 + $0x10] sm:$0xf]
          %v2141 = vld [vmem:[#allocation15 + $0x14] sm:$0xf]
          %v2142 = vld [vmem:[#allocation15 + $0x18] sm:$0xf]
          %v2143 = vld [vmem:[#allocation15 + $0x1c] sm:$0xf]
          %v2144 = vld [vmem:[#allocation15 + $0x20] sm:$0xf]
          %v2145 = vld [vmem:[#allocation15 + $0x24] sm:$0xf]
          %v2146 = vld [vmem:[#allocation15 + $0x28] sm:$0xf]
          %v2147 = vld [vmem:[#allocation15 + $0x2c] sm:$0xf]
          %v2148 = vld [vmem:[#allocation15 + $0x30] sm:$0xf]
          %v2149 = vld [vmem:[#allocation15 + $0x34] sm:$0xf]
          %v2150 = vld [vmem:[#allocation15 + $0x38] sm:$0xf]
          %v2151 = vld [vmem:[#allocation15 + $0x3c] sm:$0xf]
          %v2152 = vld [vmem:[%s11] sm:$0x1]
          %v2154 = vlaneseq
          %v2155 = vshrl.u32 %v2154, 7
          %v2156 = vsub.s32 0, %v2155
          %v2157 = vrot.slane %v2152, %v2156
          %v2175 = vunpack.c.l.b16 %v2136
          %v2176 = vunpack.c.l.b16 %v2137
          %v2177 = vunpack.c.l.b16 %v2138
          %v2178 = vunpack.c.l.b16 %v2139
          %v2179 = vunpack.c.l.b16 %v2140
          %v2180 = vunpack.c.l.b16 %v2141
          %v2181 = vunpack.c.l.b16 %v2142
          %v2182 = vunpack.c.l.b16 %v2143
          %v2183 = vunpack.c.l.b16 %v2144
          %v2184 = vunpack.c.l.b16 %v2145
          %v2185 = vunpack.c.l.b16 %v2146
          %v2186 = vunpack.c.l.b16 %v2147
          %v2187 = vunpack.c.l.b16 %v2148
          %v2188 = vunpack.c.l.b16 %v2149
          %v2189 = vunpack.c.l.b16 %v2150
          %v2190 = vunpack.c.l.b16 %v2151
          %v2191 = vpack.c.b16 %v2176, %v2175
          %v2192 = vpack.c.b16 %v2178, %v2177
          %v2193 = vpack.c.b16 %v2180, %v2179
          %v2194 = vpack.c.b16 %v2182, %v2181
          %v2195 = vpack.c.b16 %v2184, %v2183
          %v2196 = vpack.c.b16 %v2186, %v2185
          %v2197 = vpack.c.b16 %v2188, %v2187
          %v2198 = vpack.c.b16 %v2190, %v2189
          %2207 = vmatprep.subr.bf16.mxu0 0
          %2208 = vmatpush1.bf16.msra.mxu0 %v2191
          %2209 = vmatprep.subr.bf16.mxu0 0
          %2210 = vmatpush1.bf16.msra.mxu0 %v2192
          %2211 = vmatprep.subr.bf16.mxu0 0
          %2212 = vmatpush1.bf16.msra.mxu0 %v2193
          %2213 = vmatprep.subr.bf16.mxu0 0
          %2214 = vmatpush1.bf16.msra.mxu0 %v2194
          %2215 = vmatprep.subr.bf16.mxu0 0
          %2216 = vmatpush1.bf16.msra.mxu0 %v2195
          %2217 = vmatprep.subr.bf16.mxu0 0
          %2218 = vmatpush1.bf16.msra.mxu0 %v2196
          %2219 = vmatprep.subr.bf16.mxu0 0
          %2220 = vmatpush1.bf16.msra.mxu0 %v2197
          %2221 = vmatprep.subr.bf16.mxu0 0
          %2222 = vmatpush1.bf16.msra.mxu0 %v2198
          %2223 = vmatprep.subr.bf16.mxu0 0
          %2224 = vmatpush1.bf16.msra.mxu0 0
          %2225 = vmatprep.subr.bf16.mxu0 0
          %2226 = vmatpush1.bf16.msra.mxu0 0
          %2227 = vmatprep.subr.bf16.mxu0 0
          %2228 = vmatpush1.bf16.msra.mxu0 0
          %2229 = vmatprep.subr.bf16.mxu0 0
          %2230 = vmatpush1.bf16.msra.mxu0 0
          %2231 = vmatprep.subr.bf16.mxu0 0
          %2232 = vmatpush1.bf16.msra.mxu0 0
          %2233 = vmatprep.subr.bf16.mxu0 0
          %2234 = vmatpush1.bf16.msra.mxu0 0
          %2235 = vmatprep.subr.bf16.mxu0 0
          %2236 = vmatpush1.bf16.msra.mxu0 0
          %2237 = vmatprep.subr.bf16.mxu0 0
          %2238 = vmatpush1.bf16.msra.mxu0 0
          %2239 = vmatprep.mubr.bf16.mxu0 0
          %2240 = vmatmul.mubr.bf16.gmra.mrb[0].mxu0 %v2135
          %v2241 = vpop.f32.mrb[0].mxu0
          %v2242 = vadd.f32 %v2157, %v2241
          %v2243 = vpop.f32.mrb[0].mxu0
          %v2244 = vpop.f32.mrb[0].mxu0
          %v2245 = vpop.f32.mrb[0].mxu0
          %2246 = vdwg.mxu0
          %v2247 = vtanh.pop %v2242
          %2248 = vst [vmem:[#allocation17] sm:$0x3] %v2247
        $region108: #{tpu_custom_call.1} parent=67 // pred_fallthru
          _
        // Predicated region
        $region109: #{tpu_custom_call.1} parent=67 // pred_check
          %p2249 = pneg %p297
        $region110: #{tpu_custom_call.1} parent=67 // pred_check_branch
          %2251 = sbr.rel (%p2249) target = $region112
        $region111: #{tpu_custom_call.1} parent=67 // pred_region
          %s2253 = ssub.s32 32, 32
          %2254 = vsyncadd [#allocation5], %s2253
          %s2256 = sshll.u32 [#allocation17], 4
          %s2257 = int_to_ptr.vmem [resolvable:$true] %s2256
          %2259 = dma.vmem_to_hbm [thread:$0]  %s2257, 32, %s12, [#allocation5]
        $region112: #{tpu_custom_call.1} parent=67 // pred_fallthru
          _
        // Predicated region
        $region113: #{tpu_custom_call.1} parent=67 // pred_check
          %p2260 = pneg %p318
        $region114: #{tpu_custom_call.1} parent=67 // pred_check_branch
          %2262 = sbr.rel (%p2260) target = $region116
        $region115: #{tpu_custom_call.1} parent=67 // pred_region
          %s2264 = ssub.s32 64, 64
          %2265 = vsyncadd [#allocation19], %s2264
          %s2267 = sshll.u32 [#allocation18], 4
          %s2268 = int_to_ptr.vmem [resolvable:$true] %s2267
          %2270 = dma.vmem_to_hbm [thread:$0]  %s2268, 64, %s13, [#allocation19]
        $region116: #{tpu_custom_call.1} parent=67 // pred_fallthru
          _
        // Predicated region
        $region117: #{tpu_custom_call.1} parent=67 // pred_check
          %p2271 = pneg %p297
        $region118: #{tpu_custom_call.1} parent=67 // pred_check_branch
          %2273 = sbr.rel (%p2271) target = $region120
        $region119: #{tpu_custom_call.1} parent=67 // pred_region
          %2274 = dma.done [#allocation5], 32
        $region120: #{tpu_custom_call.1} parent=67 // pred_fallthru
          _
        // Predicated region
        $region121: #{tpu_custom_call.1} parent=67 // pred_check
          %p2275 = pneg %p318
        $region122: #{tpu_custom_call.1} parent=67 // pred_check_branch
          %2277 = sbr.rel (%p2275) target = $region124
        $region123: #{tpu_custom_call.1} parent=67 // pred_region
          %2278 = dma.done [#allocation19], 64
        $region124: #{tpu_custom_call.1} parent=67 // pred_fallthru
          _
      $region68: #{tpu_custom_call.1} parent=5 // pred_fallthru
        _
      %p2279 = scmp.le.s32.totalorder 2, %s27
      // Predicated region
      $region125: #{tpu_custom_call.1} parent=5 // pred_check
        %p2280 = pneg %p2279
      $region126: #{tpu_custom_call.1} parent=5 // pred_check_branch
        %2282 = sbr.rel (%p2280) target = $region128
      $region127: #{tpu_custom_call.1} parent=5 // pred_region
        %s2283 = ssub.s32 %s27, 2
      $region128: #{tpu_custom_call.1} parent=5 // pred_fallthru
        _
    $region6: #{tpu_custom_call.1} parent=1 // loop_footer
      %s31 = sadd.s32 1, %s27
    $region7: #{tpu_custom_call.1} parent=1 // loop_footer_branch
      %26 = sbr.rel target = $region3
    $region8: #{tpu_custom_call.1} parent=1 // loop_exit
      _
    %2284 = vsyncpa [#allocation4], 1
    %s2285 = scalar_lea.sflag [#allocation4], 1
    %2286 = vsyncpa %s2285, 1
    %2287 = vsyncpa [#allocation7], 1
    %2288 = vsyncpa [#allocation10], 1
    %2289 = vsyncpa [#allocation13], 1
    %2290 = vsyncpa [#allocation16], 1
    %2291 = vsyncpa [#allocation5], 1
    %s2292 = scalar_lea.sflag [#allocation5], 1
    %2293 = vsyncpa %s2292, 1
    %2294 = vsyncpa [#allocation19], 1

</llo_original>
